<compile_context>
chip_gen: v6e
topology: v6e:2x2x1
jax: 0.10.0
libtpu: 0.0.40
codegen_flags: <defaults>
</compile_context>

<pallas_src>
import jax
import jax.numpy as jnp
from jax.experimental import pallas as pl
from jax.experimental.pallas import tpu as pltpu


def resblock_kernel(x_ref, y_ref,
                    wsh_ref, wsc_ref, wga_ref,
                    bsh_ref, bsc_ref, bga_ref,
                    w1_ref, b1_ref, w2_ref, b2_ref, o_ref):
    x = x_ref[...]                                    # (tb, C) f32
    y = y_ref[...]                                    # (tb, C) f32

    # SiLU(y) in f32 (VPU/EUP), single downcast for the MXU.
    y_act = (y * jax.nn.sigmoid(y)).astype(jnp.bfloat16)

    # Modulation: three lane-aligned (C, C) bf16 dots, f32 accumulation.
    shift = jnp.dot(y_act, wsh_ref[...], preferred_element_type=jnp.float32) + bsh_ref[...]
    scale = jnp.dot(y_act, wsc_ref[...], preferred_element_type=jnp.float32) + bsc_ref[...]
    gate = jnp.dot(y_act, wga_ref[...], preferred_element_type=jnp.float32) + bga_ref[...]

    # LayerNorm over channels, eps=1e-6, no affine -- all f32.
    mean = jnp.mean(x, axis=-1, keepdims=True)
    cen = x - mean
    var = jnp.mean(cen * cen, axis=-1, keepdims=True)
    xn = cen * jax.lax.rsqrt(var + 1e-6)

    h = xn * (scale + 1.0) + shift

    # MLP: Linear -> SiLU -> Linear (bf16 MXU inputs, f32 accumulate).
    h1 = jnp.dot(h.astype(jnp.bfloat16), w1_ref[...],
                 preferred_element_type=jnp.float32) + b1_ref[...]
    h1 = h1 * jax.nn.sigmoid(h1)
    h2 = jnp.dot(h1.astype(jnp.bfloat16), w2_ref[...],
                 preferred_element_type=jnp.float32) + b2_ref[...]

    # Gated residual in f32.
    o_ref[...] = (x + gate * h2).astype(o_ref.dtype)


def _pick_tb(B):
    """Largest row tile (<=512, multiple of 8) that still leaves >=2 grid steps
    (so v7x megacore has work on both TCs); fall back to the whole batch."""
    for t in (512, 256, 128, 64, 32, 16, 8):
        if B % t == 0 and B // t >= 2:
            return t
    return B


def resblock_forward(x, y, params, *, tb=None):
    """x, y: (B, C) float32. params: dict of (in, out)-layout weights."""
    B, C = x.shape
    if tb is None:
        tb = _pick_tb(B)
    assert B % tb == 0, f"tb={tb} must divide B={B}"

    f32, bf16 = jnp.float32, jnp.bfloat16

    # Pre-split the modulation weight into lane-aligned (C, C) slabs and cast
    # matmul weights to bf16 (halves weight DMA, 2-4x MXU throughput).
    wmod = params["wmod"]                       # (C, 3C)
    bmod = params["bmod"].astype(f32)           # (1, 3C)
    wsh = wmod[:, 0 * C:1 * C].astype(bf16)
    wsc = wmod[:, 1 * C:2 * C].astype(bf16)
    wga = wmod[:, 2 * C:3 * C].astype(bf16)
    bsh, bsc, bga = bmod[:, :C], bmod[:, C:2 * C], bmod[:, 2 * C:]
    w1, b1 = params["w1"].astype(bf16), params["b1"].astype(f32)
    w2, b2 = params["w2"].astype(bf16), params["b2"].astype(f32)

    weights = (wsh, wsc, wga, bsh, bsc, bga, w1, b1, w2, b2)

    grid = (B // tb,)
    row_spec = pl.BlockSpec((tb, C), lambda i: (i, 0))

    def full(a):
        return pl.BlockSpec(a.shape, lambda i: (0, 0))

    # Raise the scoped-VMEM limit only when the resident footprint needs it
    # (row tiles and weights are double-buffered by the pipeline).
    tile_bytes = 3 * 2 * tb * C * 4                       # x, y, out; 2 buffers
    weight_bytes = 2 * sum(int(a.nbytes) for a in weights)
    vmem_need = tile_bytes + weight_bytes + (1 << 20)
    cparams = {"dimension_semantics": ("parallel",)}
    if vmem_need > (32 << 20):
        cparams["vmem_limit_bytes"] = min(int(vmem_need * 5 // 4), 96 << 20)
    # TODO(synk): for very large C, tile the K/N axes of the matmuls with an
    # extra "arbitrary" grid axis instead of keeping full weights resident.

    out = pl.pallas_call(
        resblock_kernel,
        out_shape=jax.ShapeDtypeStruct((B, C), x.dtype),
        grid_spec=pltpu.PrefetchScalarGridSpec(
            num_scalar_prefetch=0,
            grid=grid,
            in_specs=[row_spec, row_spec] + [full(a) for a in weights],
            out_specs=row_spec,
        ),
        compiler_params=pltpu.CompilerParams(**cparams),
    )(x, y, *weights)
    return out


def resblock_reference(x, y, params, *, mxu_dtype=jnp.bfloat16):
    """Pure-JAX reference. mxu_dtype=bf16 mirrors the kernel's MXU numerics;
    mxu_dtype=f32 mirrors the original (f32) PyTorch module."""
    silu = lambda t: t * jax.nn.sigmoid(t)
    C = x.shape[-1]
    dot = lambda a, w: jnp.dot(a.astype(mxu_dtype), w.astype(mxu_dtype),
                               preferred_element_type=jnp.float32)
    mod = dot(silu(y), params["wmod"]) + params["bmod"]
    shift, scale, gate = mod[:, :C], mod[:, C:2 * C], mod[:, 2 * C:]
    mean = jnp.mean(x, axis=-1, keepdims=True)
    var = jnp.mean((x - mean) ** 2, axis=-1, keepdims=True)
    xn = (x - mean) * jax.lax.rsqrt(var + 1e-6)
    h = xn * (scale + 1.0) + shift
    h1 = silu(dot(h, params["w1"]) + params["b1"])
    h2 = dot(h1, params["w2"]) + params["b2"]
    return x + gate * h2


def init_params(key, channels):
    """Deterministic synthetic init (PyTorch Linear-like uniform fan-in)."""
    ks = jax.random.split(key, 6)
    C = channels

    def lin(kw, kb, fan_in, fan_out):
        bound = 1.0 / jnp.sqrt(fan_in)
        # stored as (in, out) == transposed PyTorch weight
        w = jax.random.uniform(kw, (fan_in, fan_out), jnp.float32, -bound, bound)
        b = jax.random.uniform(kb, (1, fan_out), jnp.float32, -bound, bound)
        return w, b

    w1, b1 = lin(ks[0], ks[1], C, C)          # mlp[0]
    w2, b2 = lin(ks[2], ks[3], C, C)          # mlp[2]
    wmod, bmod = lin(ks[4], ks[5], C, 3 * C)  # modulation[1]
    return {"wmod": wmod, "bmod": bmod, "w1": w1, "b1": b1, "w2": w2, "b2": b2}


if __name__ == "__main__":
    key = jax.random.PRNGKey(0)
    kx, ky, kp = jax.random.split(key, 3)

    # Small but lane-dense demo shapes: C=128 fills the 128-lane vregs (no
    # masked vst), and tb=128 fills the MXU M dim while leaving 2 grid steps.
    B, C = 256, 128
    x = jax.random.normal(kx, (B, C), jnp.float32)
    y = jax.random.normal(ky, (B, C), jnp.float32)
    params = init_params(kp, C)

    out = resblock_forward(x, y, params)
    out = jax.block_until_ready(out)
    assert out.shape == (B, C) and out.dtype == jnp.float32

    # Tight check vs a reference mirroring the kernel's bf16-MXU numerics.
    ref_bf16 = resblock_reference(x, y, params, mxu_dtype=jnp.bfloat16)
    assert jnp.allclose(out, ref_bf16, rtol=2e-3, atol=2e-3), "mismatch (bf16 ref)"

    # Looser semantic check vs the full-f32 (PyTorch-equivalent) reference.
    ref_f32 = resblock_reference(x, y, params, mxu_dtype=jnp.float32)
    assert jnp.allclose(out, ref_f32, rtol=3e-2, atol=3e-2), "mismatch (f32 ref)"

    print("KERNEL_OK")
</pallas_src>

<mosaic_0001>
module attributes {stable_mosaic.version = 11 : i64} {
  func.func @resblock_kernel(%arg0: i32, %arg1: memref<128x128xf32, #tpu.memory_space<vmem>>, %arg2: memref<128x128xf32, #tpu.memory_space<vmem>>, %arg3: memref<128x128xbf16, #tpu.memory_space<vmem>>, %arg4: memref<128x128xbf16, #tpu.memory_space<vmem>>, %arg5: memref<128x128xbf16, #tpu.memory_space<vmem>>, %arg6: memref<1x128xf32, #tpu.memory_space<vmem>>, %arg7: memref<1x128xf32, #tpu.memory_space<vmem>>, %arg8: memref<1x128xf32, #tpu.memory_space<vmem>>, %arg9: memref<128x128xbf16, #tpu.memory_space<vmem>>, %arg10: memref<1x128xf32, #tpu.memory_space<vmem>>, %arg11: memref<128x128xbf16, #tpu.memory_space<vmem>>, %arg12: memref<1x128xf32, #tpu.memory_space<vmem>>, %arg13: memref<128x128xf32, #tpu.memory_space<vmem>>) attributes {dimension_semantics = [#tpu.dimension_semantics<parallel>], iteration_bounds = array<i64: 2>, scalar_prefetch = 0 : i64, scratch_operands = 0 : i64, tpu.core_type = #tpu.core_type<tc>, window_params = [{transform_indices = @transform_0, window_bounds = array<i64: 128, 128>}, {transform_indices = @transform_1, window_bounds = array<i64: 128, 128>}, {pipeline_mode = #tpu.pipeline_mode<synchronous>, transform_indices = @transform_2, window_bounds = array<i64: 128, 128>}, {pipeline_mode = #tpu.pipeline_mode<synchronous>, transform_indices = @transform_3, window_bounds = array<i64: 128, 128>}, {pipeline_mode = #tpu.pipeline_mode<synchronous>, transform_indices = @transform_4, window_bounds = array<i64: 128, 128>}, {pipeline_mode = #tpu.pipeline_mode<synchronous>, transform_indices = @transform_5, window_bounds = array<i64: 1, 128>}, {pipeline_mode = #tpu.pipeline_mode<synchronous>, transform_indices = @transform_6, window_bounds = array<i64: 1, 128>}, {pipeline_mode = #tpu.pipeline_mode<synchronous>, transform_indices = @transform_7, window_bounds = array<i64: 1, 128>}, {pipeline_mode = #tpu.pipeline_mode<synchronous>, transform_indices = @transform_8, window_bounds = array<i64: 128, 128>}, {pipeline_mode = #tpu.pipeline_mode<synchronous>, transform_indices = @transform_9, window_bounds = array<i64: 1, 128>}, {pipeline_mode = #tpu.pipeline_mode<synchronous>, transform_indices = @transform_10, window_bounds = array<i64: 128, 128>}, {pipeline_mode = #tpu.pipeline_mode<synchronous>, transform_indices = @transform_11, window_bounds = array<i64: 1, 128>}, {transform_indices = @transform_12, window_bounds = array<i64: 128, 128>}]} {
    %c0 = arith.constant 0 : index
    %c0_0 = arith.constant 0 : index
    %0 = vector.load %arg1[%c0, %c0_0] : memref<128x128xf32, #tpu.memory_space<vmem>>, vector<128x128xf32>
    %c0_1 = arith.constant 0 : index
    %c0_2 = arith.constant 0 : index
    %1 = vector.load %arg2[%c0_1, %c0_2] : memref<128x128xf32, #tpu.memory_space<vmem>>, vector<128x128xf32>
    %2 = arith.negf %1 : vector<128x128xf32>
    %3 = math.exp %2 : vector<128x128xf32>
    %cst = arith.constant 1.000000e+00 : f32
    %4 = vector.broadcast %cst : f32 to vector<128x128xf32>
    %5 = arith.addf %4, %3 : vector<128x128xf32>
    %6 = arith.divf %4, %5 : vector<128x128xf32>
    %7 = arith.mulf %1, %6 : vector<128x128xf32>
    %8 = arith.truncf %7 : vector<128x128xf32> to vector<128x128xbf16>
    %c0_3 = arith.constant 0 : index
    %c0_4 = arith.constant 0 : index
    %9 = vector.load %arg3[%c0_3, %c0_4] : memref<128x128xbf16, #tpu.memory_space<vmem>>, vector<128x128xbf16>
    %cst_5 = arith.constant dense<0.000000e+00> : vector<128x128xf32>
    %10 = tpu.matmul %8, %9, %cst_5 {dimension_numbers = #tpu.dot_dimension_numbers<[1], [0], [0], [1], [0, 0, 1, 1], [], []>} : vector<128x128xbf16>, vector<128x128xbf16>, vector<128x128xf32> -> vector<128x128xf32>
    %c0_6 = arith.constant 0 : index
    %c0_7 = arith.constant 0 : index
    %11 = vector.load %arg6[%c0_6, %c0_7] : memref<1x128xf32, #tpu.memory_space<vmem>>, vector<1x128xf32>
    %12 = vector.broadcast %11 : vector<1x128xf32> to vector<128x128xf32>
    %13 = arith.addf %10, %12 : vector<128x128xf32>
    %c0_8 = arith.constant 0 : index
    %c0_9 = arith.constant 0 : index
    %14 = vector.load %arg4[%c0_8, %c0_9] : memref<128x128xbf16, #tpu.memory_space<vmem>>, vector<128x128xbf16>
    %cst_10 = arith.constant dense<0.000000e+00> : vector<128x128xf32>
    %15 = tpu.matmul %8, %14, %cst_10 {dimension_numbers = #tpu.dot_dimension_numbers<[1], [0], [0], [1], [0, 0, 1, 1], [], []>} : vector<128x128xbf16>, vector<128x128xbf16>, vector<128x128xf32> -> vector<128x128xf32>
    %c0_11 = arith.constant 0 : index
    %c0_12 = arith.constant 0 : index
    %16 = vector.load %arg7[%c0_11, %c0_12] : memref<1x128xf32, #tpu.memory_space<vmem>>, vector<1x128xf32>
    %17 = vector.broadcast %16 : vector<1x128xf32> to vector<128x128xf32>
    %18 = arith.addf %15, %17 : vector<128x128xf32>
    %c0_13 = arith.constant 0 : index
    %c0_14 = arith.constant 0 : index
    %19 = vector.load %arg5[%c0_13, %c0_14] : memref<128x128xbf16, #tpu.memory_space<vmem>>, vector<128x128xbf16>
    %cst_15 = arith.constant dense<0.000000e+00> : vector<128x128xf32>
    %20 = tpu.matmul %8, %19, %cst_15 {dimension_numbers = #tpu.dot_dimension_numbers<[1], [0], [0], [1], [0, 0, 1, 1], [], []>} : vector<128x128xbf16>, vector<128x128xbf16>, vector<128x128xf32> -> vector<128x128xf32>
    %c0_16 = arith.constant 0 : index
    %c0_17 = arith.constant 0 : index
    %21 = vector.load %arg8[%c0_16, %c0_17] : memref<1x128xf32, #tpu.memory_space<vmem>>, vector<1x128xf32>
    %22 = vector.broadcast %21 : vector<1x128xf32> to vector<128x128xf32>
    %23 = arith.addf %20, %22 : vector<128x128xf32>
    %cst_18 = arith.constant dense<0.000000e+00> : vector<128xf32>
    %24 = vector.multi_reduction <add>, %0, %cst_18 [1] : vector<128x128xf32> to vector<128xf32>
    %25 = vector.shape_cast %24 : vector<128xf32> to vector<128x1xf32>
    %cst_19 = arith.constant 1.280000e+02 : f32
    %26 = vector.broadcast %cst_19 : f32 to vector<128x1xf32>
    %27 = arith.divf %25, %26 : vector<128x1xf32>
    %28 = vector.broadcast %27 : vector<128x1xf32> to vector<128x128xf32>
    %29 = arith.subf %0, %28 : vector<128x128xf32>
    %30 = arith.mulf %29, %29 : vector<128x128xf32>
    %cst_20 = arith.constant dense<0.000000e+00> : vector<128xf32>
    %31 = vector.multi_reduction <add>, %30, %cst_20 [1] : vector<128x128xf32> to vector<128xf32>
    %32 = vector.shape_cast %31 : vector<128xf32> to vector<128x1xf32>
    %cst_21 = arith.constant 1.280000e+02 : f32
    %33 = vector.broadcast %cst_21 : f32 to vector<128x1xf32>
    %34 = arith.divf %32, %33 : vector<128x1xf32>
    %cst_22 = arith.constant 9.99999997E-7 : f32
    %35 = vector.broadcast %cst_22 : f32 to vector<128x1xf32>
    %36 = arith.addf %34, %35 : vector<128x1xf32>
    %37 = math.rsqrt %36 : vector<128x1xf32>
    %38 = vector.broadcast %37 : vector<128x1xf32> to vector<128x128xf32>
    %39 = arith.mulf %29, %38 : vector<128x128xf32>
    %cst_23 = arith.constant 1.000000e+00 : f32
    %40 = vector.broadcast %cst_23 : f32 to vector<128x128xf32>
    %41 = arith.addf %18, %40 : vector<128x128xf32>
    %42 = arith.mulf %39, %41 : vector<128x128xf32>
    %43 = arith.addf %42, %13 : vector<128x128xf32>
    %44 = arith.truncf %43 : vector<128x128xf32> to vector<128x128xbf16>
    %c0_24 = arith.constant 0 : index
    %c0_25 = arith.constant 0 : index
    %45 = vector.load %arg9[%c0_24, %c0_25] : memref<128x128xbf16, #tpu.memory_space<vmem>>, vector<128x128xbf16>
    %cst_26 = arith.constant dense<0.000000e+00> : vector<128x128xf32>
    %46 = tpu.matmul %44, %45, %cst_26 {dimension_numbers = #tpu.dot_dimension_numbers<[1], [0], [0], [1], [0, 0, 1, 1], [], []>} : vector<128x128xbf16>, vector<128x128xbf16>, vector<128x128xf32> -> vector<128x128xf32>
    %c0_27 = arith.constant 0 : index
    %c0_28 = arith.constant 0 : index
    %47 = vector.load %arg10[%c0_27, %c0_28] : memref<1x128xf32, #tpu.memory_space<vmem>>, vector<1x128xf32>
    %48 = vector.broadcast %47 : vector<1x128xf32> to vector<128x128xf32>
    %49 = arith.addf %46, %48 : vector<128x128xf32>
    %50 = arith.negf %49 : vector<128x128xf32>
    %51 = math.exp %50 : vector<128x128xf32>
    %cst_29 = arith.constant 1.000000e+00 : f32
    %52 = vector.broadcast %cst_29 : f32 to vector<128x128xf32>
    %53 = arith.addf %52, %51 : vector<128x128xf32>
    %54 = arith.divf %52, %53 : vector<128x128xf32>
    %55 = arith.mulf %49, %54 : vector<128x128xf32>
    %56 = arith.truncf %55 : vector<128x128xf32> to vector<128x128xbf16>
    %c0_30 = arith.constant 0 : index
    %c0_31 = arith.constant 0 : index
    %57 = vector.load %arg11[%c0_30, %c0_31] : memref<128x128xbf16, #tpu.memory_space<vmem>>, vector<128x128xbf16>
    %cst_32 = arith.constant dense<0.000000e+00> : vector<128x128xf32>
    %58 = tpu.matmul %56, %57, %cst_32 {dimension_numbers = #tpu.dot_dimension_numbers<[1], [0], [0], [1], [0, 0, 1, 1], [], []>} : vector<128x128xbf16>, vector<128x128xbf16>, vector<128x128xf32> -> vector<128x128xf32>
    %c0_33 = arith.constant 0 : index
    %c0_34 = arith.constant 0 : index
    %59 = vector.load %arg12[%c0_33, %c0_34] : memref<1x128xf32, #tpu.memory_space<vmem>>, vector<1x128xf32>
    %60 = vector.broadcast %59 : vector<1x128xf32> to vector<128x128xf32>
    %61 = arith.addf %58, %60 : vector<128x128xf32>
    %62 = arith.mulf %23, %61 : vector<128x128xf32>
    %63 = arith.addf %0, %62 : vector<128x128xf32>
    %c0_35 = arith.constant 0 : index
    %c0_36 = arith.constant 0 : index
    %64 = vector.load %arg13[%c0_35, %c0_36] : memref<128x128xf32, #tpu.memory_space<vmem>>, vector<128x128xf32>
    tpu.vector_store %arg13[%c0_35, %c0_36], %63 {strides = array<i32>} : memref<128x128xf32, #tpu.memory_space<vmem>>, vector<128x128xf32>,
    return
  }
  func.func @transform_0(%arg0: i32) -> (i32, i32) {
    %c0_i32 = arith.constant 0 : i32
    %c0_i32_0 = arith.constant 0 : i32
    return %arg0, %c0_i32 : i32, i32
  }
  func.func @transform_1(%arg0: i32) -> (i32, i32) {
    %c0_i32 = arith.constant 0 : i32
    %c0_i32_0 = arith.constant 0 : i32
    return %arg0, %c0_i32 : i32, i32
  }
  func.func @transform_2(%arg0: i32) -> (i32, i32) {
    %c0_i32 = arith.constant 0 : i32
    %c0_i32_0 = arith.constant 0 : i32
    %c0_i32_1 = arith.constant 0 : i32
    return %c0_i32, %c0_i32_0 : i32, i32
  }
  func.func @transform_3(%arg0: i32) -> (i32, i32) {
    %c0_i32 = arith.constant 0 : i32
    %c0_i32_0 = arith.constant 0 : i32
    %c0_i32_1 = arith.constant 0 : i32
    return %c0_i32, %c0_i32_0 : i32, i32
  }
  func.func @transform_4(%arg0: i32) -> (i32, i32) {
    %c0_i32 = arith.constant 0 : i32
    %c0_i32_0 = arith.constant 0 : i32
    %c0_i32_1 = arith.constant 0 : i32
    return %c0_i32, %c0_i32_0 : i32, i32
  }
  func.func @transform_5(%arg0: i32) -> (i32, i32) {
    %c0_i32 = arith.constant 0 : i32
    %c0_i32_0 = arith.constant 0 : i32
    %c0_i32_1 = arith.constant 0 : i32
    return %c0_i32, %c0_i32_0 : i32, i32
  }
  func.func @transform_6(%arg0: i32) -> (i32, i32) {
    %c0_i32 = arith.constant 0 : i32
    %c0_i32_0 = arith.constant 0 : i32
    %c0_i32_1 = arith.constant 0 : i32
    return %c0_i32, %c0_i32_0 : i32, i32
  }
  func.func @transform_7(%arg0: i32) -> (i32, i32) {
    %c0_i32 = arith.constant 0 : i32
    %c0_i32_0 = arith.constant 0 : i32
    %c0_i32_1 = arith.constant 0 : i32
    return %c0_i32, %c0_i32_0 : i32, i32
  }
  func.func @transform_8(%arg0: i32) -> (i32, i32) {
    %c0_i32 = arith.constant 0 : i32
    %c0_i32_0 = arith.constant 0 : i32
    %c0_i32_1 = arith.constant 0 : i32
    return %c0_i32, %c0_i32_0 : i32, i32
  }
  func.func @transform_9(%arg0: i32) -> (i32, i32) {
    %c0_i32 = arith.constant 0 : i32
    %c0_i32_0 = arith.constant 0 : i32
    %c0_i32_1 = arith.constant 0 : i32
    return %c0_i32, %c0_i32_0 : i32, i32
  }
  func.func @transform_10(%arg0: i32) -> (i32, i32) {
    %c0_i32 = arith.constant 0 : i32
    %c0_i32_0 = arith.constant 0 : i32
    %c0_i32_1 = arith.constant 0 : i32
    return %c0_i32, %c0_i32_0 : i32, i32
  }
  func.func @transform_11(%arg0: i32) -> (i32, i32) {
    %c0_i32 = arith.constant 0 : i32
    %c0_i32_0 = arith.constant 0 : i32
    %c0_i32_1 = arith.constant 0 : i32
    return %c0_i32, %c0_i32_0 : i32, i32
  }
  func.func @transform_12(%arg0: i32) -> (i32, i32) {
    %c0_i32 = arith.constant 0 : i32
    %c0_i32_0 = arith.constant 0 : i32
    return %arg0, %c0_i32 : i32, i32
  }
}

</mosaic_0001>

<llo_original>
// kernel: tpu_custom_call.1
$region0: #{tpu_custom_call.1}
  #allocation0 [shape = 'u32[]', space=smem, size = 0x4, offset = 0x4, fixed_abs, tag = 'smem constant byte address 0x4 - core index']
  #allocation1 [shape = 'u32[144,128]{1,0:T(1,128)}', space=vmem, size = 0x12000, scoped, tag = 'internal scratch']
  %s0 = inlined_call_operand.hbm [shape: f32[256,128], index: 0, kind: input, shape index: {}]
  %s1 = inlined_call_operand.hbm [shape: f32[256,128], index: 1, kind: input, shape index: {}]
  %s2 = inlined_call_operand.hbm [shape: bf16[128,128], index: 2, kind: input, shape index: {}]
  %s3 = inlined_call_operand.hbm [shape: bf16[128,128], index: 3, kind: input, shape index: {}]
  %s4 = inlined_call_operand.hbm [shape: bf16[128,128], index: 4, kind: input, shape index: {}]
  %s5 = inlined_call_operand.vmem [shape: f32[1,128], index: 5, kind: input, shape index: {}]
  %s6 = inlined_call_operand.vmem [shape: f32[1,128], index: 6, kind: input, shape index: {}]
  %s7 = inlined_call_operand.vmem [shape: f32[1,128], index: 7, kind: input, shape index: {}]
  %s8 = inlined_call_operand.hbm [shape: bf16[128,128], index: 8, kind: input, shape index: {}]
  %s9 = inlined_call_operand.vmem [shape: f32[1,128], index: 9, kind: input, shape index: {}]
  %s10 = inlined_call_operand.hbm [shape: bf16[128,128], index: 10, kind: input, shape index: {}]
  %s11 = inlined_call_operand.vmem [shape: f32[1,128], index: 11, kind: input, shape index: {}]
  %s12 = inlined_call_operand.hbm [shape: f32[256,128], index: 12, kind: output, shape index: {}]
  %s13 = sld [smem:[#allocation0]]
  $region109: #{tpu_custom_call.1} parent=0
    _
  %s15 = ssub.s32 1, %s13
  %s16 = scalar_select 0, %s15, %s13
  $region1: #{tpu_custom_call.1} parent=0
    #allocation2 [shape = 'u8[131072]{0}', space=vmem, size = 0x20000, scoped, tag = 'input window, operand 0']
    #allocation3 [shape = 's32[2]{0}', space=sflag, size = 0x8, scoped, tag = 'scoped memory for tpu_custom_call.1']
    #allocation4 [shape = 's32[2]{0}', space=sflag, size = 0x8, scoped, tag = 'scoped memory for tpu_custom_call.1']
    #allocation5 [shape = 'u8[131072]{0}', space=vmem, size = 0x20000, scoped, tag = 'input window, operand 1']
    #allocation6 [shape = 's32[2]{0}', space=sflag, size = 0x8, scoped, tag = 'scoped memory for tpu_custom_call.1']
    #allocation7 [shape = 'u8[32768]{0}', space=vmem, size = 0x8000, scoped, tag = 'input window, operand 2, single buffered']
    #allocation8 [shape = 'u8[32768]{0}', space=vmem, size = 0x8000, scoped, tag = 'input window, operand 3, single buffered']
    #allocation9 [shape = 's32[1]{0}', space=sflag, size = 0x4, scoped, tag = 'scoped memory for tpu_custom_call.1']
    #allocation10 [shape = 'u8[32768]{0}', space=vmem, size = 0x8000, scoped, tag = 'input window, operand 4, single buffered']
    #allocation11 [shape = 'u8[32768]{0}', space=vmem, size = 0x8000, scoped, tag = 'input window, operand 8, single buffered']
    #allocation12 [shape = 's32[1]{0}', space=sflag, size = 0x4, scoped, tag = 'scoped memory for tpu_custom_call.1']
    #allocation13 [shape = 'u8[32768]{0}', space=vmem, size = 0x8000, scoped, tag = 'input window, operand 10, single buffered']
    #allocation14 [shape = 'u8[131072]{0}', space=vmem, size = 0x20000, scoped, tag = 'output window, operand 0']
    %17 = vsyncpa [#allocation3], 0
    %s18 = scalar_lea.sflag [#allocation3], 1
    %19 = vsyncpa %s18, 0
    %20 = vsyncpa [#allocation6], 0
    %s21 = scalar_lea.sflag [#allocation6], 1
    %22 = vsyncpa %s21, 0
    %23 = vsyncpa [#allocation9], 0
    %24 = vsyncpa [#allocation12], 0
    %25 = vsyncpa [#allocation4], 0
    %s26 = scalar_lea.sflag [#allocation4], 1
    %27 = vsyncpa %s26, 0
    loop: start=0, step=1, limit=4
    $region2: #{tpu_custom_call.1} parent=1 // loop_pre_header
      _
    $region3: #{tpu_custom_call.1} parent=1 // loop_header
      %s29 = sphi 0, %s33
      %p30 = scmp.ge.s32.totalorder %s29, 4
      %s39 = sphi 0, %s41
      %s42 = sphi 0, %s39
      %s43 = sphi 0, %s42
      %s59 = sphi 0, %s43
      %s65 = sphi 0, %s67
      %s68 = sphi 0, %s65
      %s69 = sphi 0, %s68
      %s85 = sphi 0, %s69
      %s89 = sphi 0, %s89
      %s91 = sphi 0, %s89
      %s92 = sphi 0, %s91
      %s106 = sphi 0, %s92
      %s110 = sphi 0, %s110
      %s112 = sphi 0, %s110
      %s113 = sphi 0, %s112
      %s127 = sphi 0, %s113
      %s131 = sphi 0, %s131
      %s133 = sphi 0, %s131
      %s134 = sphi 0, %s133
      %s148 = sphi 0, %s134
      %s152 = sphi 0, %s152
      %s154 = sphi 0, %s152
      %s155 = sphi 0, %s154
      %s169 = sphi 0, %s155
      %s173 = sphi 0, %s173
      %s175 = sphi 0, %s173
      %s176 = sphi 0, %s175
      %s190 = sphi 0, %s176
      %s194 = sphi 0, %s194
      %s196 = sphi 0, %s194
      %s197 = sphi 0, %s196
      %s211 = sphi 0, %s197
      %s215 = sphi 0, %s215
      %s217 = sphi 0, %s215
      %s218 = sphi 0, %s217
      %s232 = sphi 0, %s218
      %s236 = sphi 0, %s236
      %s238 = sphi 0, %s236
      %s239 = sphi 0, %s238
      %s253 = sphi 0, %s239
      %s257 = sphi 0, %s257
      %s259 = sphi 0, %s257
      %s260 = sphi 0, %s259
      %s274 = sphi 0, %s260
      %s278 = sphi 0, %s278
      %s280 = sphi 0, %s278
      %s281 = sphi 0, %s280
      %s295 = sphi 0, %s281
      %s301 = sphi 0, %s303
      %s304 = sphi 0, %s301
      %s305 = sphi 0, %s304
      %s321 = sphi 0, %s305
    $region4: #{tpu_custom_call.1} parent=1 // loop_header_branch
      %32 = sbr.rel (%p30) target = $region8
    $region5: #{tpu_custom_call.1} parent=1 // loop_body
      %s34 = ssub.s32 %s29, 1
      %s35 = ssub.s32 %s29, 2
      %s36 = sadd.s32 %s29, 1
      %s37 = ssub.s32 %s29, %s36
      %p38 = scmp.eq.s32.totalorder %s37, 0
      %s40 = sadd.s32 %s39, 1
      %s41 = scalar_select %p38, %s39, %s40
      %p44 = pneg %p38
      %p45 = scmp.eq.s32.totalorder %s29, 1
      %p46 = por %p44, %p45
      %p47 = scmp.ne.s32.totalorder %s39, %s42
      %p48 = scmp.eq.s32.totalorder %s29, 0
      %p49 = por %p47, %p48
      %p50 = scmp.ne.s32.totalorder %s39, %s42
      %p51 = scmp.eq.s32.totalorder %s34, 1
      %p52 = por %p50, %p51
      %p53 = scmp.ne.s32.totalorder %s42, %s43
      %p54 = scmp.eq.s32.totalorder %s34, 0
      %p55 = por %p53, %p54
      %p56 = scmp.ne.s32.totalorder %s42, %s43
      %p57 = scmp.eq.s32.totalorder %s35, 1
      %p58 = por %p56, %p57
      %p60 = scmp.ne.s32.totalorder %s43, %s59
      %p61 = scmp.eq.s32.totalorder %s35, 0
      %p62 = por %p60, %p61
      %s63 = ssub.s32 %s29, %s36
      %p64 = scmp.eq.s32.totalorder %s63, 0
      %s66 = sadd.s32 %s65, 1
      %s67 = scalar_select %p64, %s65, %s66
      %p70 = pneg %p64
      %p71 = scmp.eq.s32.totalorder %s29, 1
      %p72 = por %p70, %p71
      %p73 = scmp.ne.s32.totalorder %s65, %s68
      %p74 = scmp.eq.s32.totalorder %s29, 0
      %p75 = por %p73, %p74
      %p76 = scmp.ne.s32.totalorder %s65, %s68
      %p77 = scmp.eq.s32.totalorder %s34, 1
      %p78 = por %p76, %p77
      %p79 = scmp.ne.s32.totalorder %s68, %s69
      %p80 = scmp.eq.s32.totalorder %s34, 0
      %p81 = por %p79, %p80
      %p82 = scmp.ne.s32.totalorder %s68, %s69
      %p83 = scmp.eq.s32.totalorder %s35, 1
      %p84 = por %p82, %p83
      %p86 = scmp.ne.s32.totalorder %s69, %s85
      %p87 = scmp.eq.s32.totalorder %s35, 0
      %p88 = por %p86, %p87
      %s90 = sadd.s32 %s89, 1
      %p93 = scmp.eq.s32.totalorder %s29, 1
      %p94 = scmp.ne.s32.totalorder %s89, %s91
      %p95 = scmp.eq.s32.totalorder %s29, 0
      %p96 = por %p94, %p95
      %p97 = scmp.ne.s32.totalorder %s89, %s91
      %p98 = scmp.eq.s32.totalorder %s34, 1
      %p99 = por %p97, %p98
      %p100 = scmp.ne.s32.totalorder %s91, %s92
      %p101 = scmp.eq.s32.totalorder %s34, 0
      %p102 = por %p100, %p101
      %p103 = scmp.ne.s32.totalorder %s91, %s92
      %p104 = scmp.eq.s32.totalorder %s35, 1
      %p105 = por %p103, %p104
      %p107 = scmp.ne.s32.totalorder %s92, %s106
      %p108 = scmp.eq.s32.totalorder %s35, 0
      %p109 = por %p107, %p108
      %s111 = sadd.s32 %s110, 1
      %p114 = scmp.eq.s32.totalorder %s29, 1
      %p115 = scmp.ne.s32.totalorder %s110, %s112
      %p116 = scmp.eq.s32.totalorder %s29, 0
      %p117 = por %p115, %p116
      %p118 = scmp.ne.s32.totalorder %s110, %s112
      %p119 = scmp.eq.s32.totalorder %s34, 1
      %p120 = por %p118, %p119
      %p121 = scmp.ne.s32.totalorder %s112, %s113
      %p122 = scmp.eq.s32.totalorder %s34, 0
      %p123 = por %p121, %p122
      %p124 = scmp.ne.s32.totalorder %s112, %s113
      %p125 = scmp.eq.s32.totalorder %s35, 1
      %p126 = por %p124, %p125
      %p128 = scmp.ne.s32.totalorder %s113, %s127
      %p129 = scmp.eq.s32.totalorder %s35, 0
      %p130 = por %p128, %p129
      %s132 = sadd.s32 %s131, 1
      %p135 = scmp.eq.s32.totalorder %s29, 1
      %p136 = scmp.ne.s32.totalorder %s131, %s133
      %p137 = scmp.eq.s32.totalorder %s29, 0
      %p138 = por %p136, %p137
      %p139 = scmp.ne.s32.totalorder %s131, %s133
      %p140 = scmp.eq.s32.totalorder %s34, 1
      %p141 = por %p139, %p140
      %p142 = scmp.ne.s32.totalorder %s133, %s134
      %p143 = scmp.eq.s32.totalorder %s34, 0
      %p144 = por %p142, %p143
      %p145 = scmp.ne.s32.totalorder %s133, %s134
      %p146 = scmp.eq.s32.totalorder %s35, 1
      %p147 = por %p145, %p146
      %p149 = scmp.ne.s32.totalorder %s134, %s148
      %p150 = scmp.eq.s32.totalorder %s35, 0
      %p151 = por %p149, %p150
      %s153 = sadd.s32 %s152, 1
      %p156 = scmp.eq.s32.totalorder %s29, 1
      %p157 = scmp.ne.s32.totalorder %s152, %s154
      %p158 = scmp.eq.s32.totalorder %s29, 0
      %p159 = por %p157, %p158
      %p160 = scmp.ne.s32.totalorder %s152, %s154
      %p161 = scmp.eq.s32.totalorder %s34, 1
      %p162 = por %p160, %p161
      %p163 = scmp.ne.s32.totalorder %s154, %s155
      %p164 = scmp.eq.s32.totalorder %s34, 0
      %p165 = por %p163, %p164
      %p166 = scmp.ne.s32.totalorder %s154, %s155
      %p167 = scmp.eq.s32.totalorder %s35, 1
      %p168 = por %p166, %p167
      %p170 = scmp.ne.s32.totalorder %s155, %s169
      %p171 = scmp.eq.s32.totalorder %s35, 0
      %p172 = por %p170, %p171
      %s174 = sadd.s32 %s173, 1
      %p177 = scmp.eq.s32.totalorder %s29, 1
      %p178 = scmp.ne.s32.totalorder %s173, %s175
      %p179 = scmp.eq.s32.totalorder %s29, 0
      %p180 = por %p178, %p179
      %p181 = scmp.ne.s32.totalorder %s173, %s175
      %p182 = scmp.eq.s32.totalorder %s34, 1
      %p183 = por %p181, %p182
      %p184 = scmp.ne.s32.totalorder %s175, %s176
      %p185 = scmp.eq.s32.totalorder %s34, 0
      %p186 = por %p184, %p185
      %p187 = scmp.ne.s32.totalorder %s175, %s176
      %p188 = scmp.eq.s32.totalorder %s35, 1
      %p189 = por %p187, %p188
      %p191 = scmp.ne.s32.totalorder %s176, %s190
      %p192 = scmp.eq.s32.totalorder %s35, 0
      %p193 = por %p191, %p192
      %s195 = sadd.s32 %s194, 1
      %p198 = scmp.eq.s32.totalorder %s29, 1
      %p199 = scmp.ne.s32.totalorder %s194, %s196
      %p200 = scmp.eq.s32.totalorder %s29, 0
      %p201 = por %p199, %p200
      %p202 = scmp.ne.s32.totalorder %s194, %s196
      %p203 = scmp.eq.s32.totalorder %s34, 1
      %p204 = por %p202, %p203
      %p205 = scmp.ne.s32.totalorder %s196, %s197
      %p206 = scmp.eq.s32.totalorder %s34, 0
      %p207 = por %p205, %p206
      %p208 = scmp.ne.s32.totalorder %s196, %s197
      %p209 = scmp.eq.s32.totalorder %s35, 1
      %p210 = por %p208, %p209
      %p212 = scmp.ne.s32.totalorder %s197, %s211
      %p213 = scmp.eq.s32.totalorder %s35, 0
      %p214 = por %p212, %p213
      %s216 = sadd.s32 %s215, 1
      %p219 = scmp.eq.s32.totalorder %s29, 1
      %p220 = scmp.ne.s32.totalorder %s215, %s217
      %p221 = scmp.eq.s32.totalorder %s29, 0
      %p222 = por %p220, %p221
      %p223 = scmp.ne.s32.totalorder %s215, %s217
      %p224 = scmp.eq.s32.totalorder %s34, 1
      %p225 = por %p223, %p224
      %p226 = scmp.ne.s32.totalorder %s217, %s218
      %p227 = scmp.eq.s32.totalorder %s34, 0
      %p228 = por %p226, %p227
      %p229 = scmp.ne.s32.totalorder %s217, %s218
      %p230 = scmp.eq.s32.totalorder %s35, 1
      %p231 = por %p229, %p230
      %p233 = scmp.ne.s32.totalorder %s218, %s232
      %p234 = scmp.eq.s32.totalorder %s35, 0
      %p235 = por %p233, %p234
      %s237 = sadd.s32 %s236, 1
      %p240 = scmp.eq.s32.totalorder %s29, 1
      %p241 = scmp.ne.s32.totalorder %s236, %s238
      %p242 = scmp.eq.s32.totalorder %s29, 0
      %p243 = por %p241, %p242
      %p244 = scmp.ne.s32.totalorder %s236, %s238
      %p245 = scmp.eq.s32.totalorder %s34, 1
      %p246 = por %p244, %p245
      %p247 = scmp.ne.s32.totalorder %s238, %s239
      %p248 = scmp.eq.s32.totalorder %s34, 0
      %p249 = por %p247, %p248
      %p250 = scmp.ne.s32.totalorder %s238, %s239
      %p251 = scmp.eq.s32.totalorder %s35, 1
      %p252 = por %p250, %p251
      %p254 = scmp.ne.s32.totalorder %s239, %s253
      %p255 = scmp.eq.s32.totalorder %s35, 0
      %p256 = por %p254, %p255
      %s258 = sadd.s32 %s257, 1
      %p261 = scmp.eq.s32.totalorder %s29, 1
      %p262 = scmp.ne.s32.totalorder %s257, %s259
      %p263 = scmp.eq.s32.totalorder %s29, 0
      %p264 = por %p262, %p263
      %p265 = scmp.ne.s32.totalorder %s257, %s259
      %p266 = scmp.eq.s32.totalorder %s34, 1
      %p267 = por %p265, %p266
      %p268 = scmp.ne.s32.totalorder %s259, %s260
      %p269 = scmp.eq.s32.totalorder %s34, 0
      %p270 = por %p268, %p269
      %p271 = scmp.ne.s32.totalorder %s259, %s260
      %p272 = scmp.eq.s32.totalorder %s35, 1
      %p273 = por %p271, %p272
      %p275 = scmp.ne.s32.totalorder %s260, %s274
      %p276 = scmp.eq.s32.totalorder %s35, 0
      %p277 = por %p275, %p276
      %s279 = sadd.s32 %s278, 1
      %p282 = scmp.eq.s32.totalorder %s29, 1
      %p283 = scmp.ne.s32.totalorder %s278, %s280
      %p284 = scmp.eq.s32.totalorder %s29, 0
      %p285 = por %p283, %p284
      %p286 = scmp.ne.s32.totalorder %s278, %s280
      %p287 = scmp.eq.s32.totalorder %s34, 1
      %p288 = por %p286, %p287
      %p289 = scmp.ne.s32.totalorder %s280, %s281
      %p290 = scmp.eq.s32.totalorder %s34, 0
      %p291 = por %p289, %p290
      %p292 = scmp.ne.s32.totalorder %s280, %s281
      %p293 = scmp.eq.s32.totalorder %s35, 1
      %p294 = por %p292, %p293
      %p296 = scmp.ne.s32.totalorder %s281, %s295
      %p297 = scmp.eq.s32.totalorder %s35, 0
      %p298 = por %p296, %p297
      %s299 = ssub.s32 %s29, %s36
      %p300 = scmp.eq.s32.totalorder %s299, 0
      %s302 = sadd.s32 %s301, 1
      %s303 = scalar_select %p300, %s301, %s302
      %p306 = pneg %p300
      %p307 = scmp.eq.s32.totalorder %s29, 1
      %p308 = por %p306, %p307
      %p309 = scmp.ne.s32.totalorder %s301, %s304
      %p310 = scmp.eq.s32.totalorder %s29, 0
      %p311 = por %p309, %p310
      %p312 = scmp.ne.s32.totalorder %s301, %s304
      %p313 = scmp.eq.s32.totalorder %s34, 1
      %p314 = por %p312, %p313
      %p315 = scmp.ne.s32.totalorder %s304, %s305
      %p316 = scmp.eq.s32.totalorder %s34, 0
      %p317 = por %p315, %p316
      %p318 = scmp.ne.s32.totalorder %s304, %s305
      %p319 = scmp.eq.s32.totalorder %s35, 1
      %p320 = por %p318, %p319
      %p322 = scmp.ne.s32.totalorder %s305, %s321
      %p323 = scmp.eq.s32.totalorder %s35, 0
      %p324 = por %p322, %p323
      %p325 = scmp.le.s32.totalorder 1, %s29
      %p326 = scmp.lt.s32.totalorder %s29, 3
      %p327 = pnand %p325, %p326
      %p328 = pneg %p327
      // Predicated region
      $region9: #{tpu_custom_call.1} parent=5 // pred_check
        _
      $region10: #{tpu_custom_call.1} parent=5 // pred_check_branch
        %330 = sbr.rel (%p327) target = $region12
      $region11: #{tpu_custom_call.1} parent=5 // pred_region
        %s331 = ssub.s32 %s29, 1
        // Predicated region
        $region13: #{tpu_custom_call.1} parent=11 // pred_check
          %p332 = pneg %p102
        $region14: #{tpu_custom_call.1} parent=11 // pred_check_branch
          %334 = sbr.rel (%p332) target = $region16
        $region15: #{tpu_custom_call.1} parent=11 // pred_region
          %s336 = ssub.s32 1024, 1024
          %337 = vsyncadd [#allocation6], %s336
          %s338 = sshll.u32 [#allocation7], 4
          %s339 = int_to_ptr.vmem [resolvable:$true] %s338
          %344 = dma.hbm_to_vmem [thread:$0]  %s2, 1024, %s339, [#allocation6], 64, 64, 4
        $region16: #{tpu_custom_call.1} parent=11 // pred_fallthru
          _
        // Predicated region
        $region17: #{tpu_custom_call.1} parent=11 // pred_check
          %p345 = pneg %p123
        $region18: #{tpu_custom_call.1} parent=11 // pred_check_branch
          %347 = sbr.rel (%p345) target = $region20
        $region19: #{tpu_custom_call.1} parent=11 // pred_region
          %s349 = ssub.s32 1024, 1024
          %350 = vsyncadd [#allocation9], %s349
          %s351 = sshll.u32 [#allocation8], 4
          %s352 = int_to_ptr.vmem [resolvable:$true] %s351
          %357 = dma.hbm_to_vmem [thread:$0]  %s3, 1024, %s352, [#allocation9], 64, 64, 4
        $region20: #{tpu_custom_call.1} parent=11 // pred_fallthru
          _
        // Predicated region
        $region21: #{tpu_custom_call.1} parent=11 // pred_check
          %p358 = pneg %p144
        $region22: #{tpu_custom_call.1} parent=11 // pred_check_branch
          %360 = sbr.rel (%p358) target = $region24
        $region23: #{tpu_custom_call.1} parent=11 // pred_region
          %s362 = ssub.s32 1024, 1024
          %363 = vsyncadd [#allocation9], %s362
          %s364 = sshll.u32 [#allocation10], 4
          %s365 = int_to_ptr.vmem [resolvable:$true] %s364
          %370 = dma.hbm_to_vmem [thread:$0]  %s4, 1024, %s365, [#allocation9], 64, 64, 4
        $region24: #{tpu_custom_call.1} parent=11 // pred_fallthru
          _
        // Predicated region
        $region25: #{tpu_custom_call.1} parent=11 // pred_check
          %p371 = pneg %p165
        $region26: #{tpu_custom_call.1} parent=11 // pred_check_branch
          %373 = sbr.rel (%p371) target = $region28
        $region27: #{tpu_custom_call.1} parent=11 // pred_region
          _
        $region28: #{tpu_custom_call.1} parent=11 // pred_fallthru
          _
        // Predicated region
        $region29: #{tpu_custom_call.1} parent=11 // pred_check
          %p374 = pneg %p186
        $region30: #{tpu_custom_call.1} parent=11 // pred_check_branch
          %376 = sbr.rel (%p374) target = $region32
        $region31: #{tpu_custom_call.1} parent=11 // pred_region
          _
        $region32: #{tpu_custom_call.1} parent=11 // pred_fallthru
          _
        // Predicated region
        $region33: #{tpu_custom_call.1} parent=11 // pred_check
          %p377 = pneg %p207
        $region34: #{tpu_custom_call.1} parent=11 // pred_check_branch
          %379 = sbr.rel (%p377) target = $region36
        $region35: #{tpu_custom_call.1} parent=11 // pred_region
          _
        $region36: #{tpu_custom_call.1} parent=11 // pred_fallthru
          _
        // Predicated region
        $region37: #{tpu_custom_call.1} parent=11 // pred_check
          %p380 = pneg %p228
        $region38: #{tpu_custom_call.1} parent=11 // pred_check_branch
          %382 = sbr.rel (%p380) target = $region40
        $region39: #{tpu_custom_call.1} parent=11 // pred_region
          %s384 = ssub.s32 1024, 1024
          %385 = vsyncadd [#allocation12], %s384
          %s386 = sshll.u32 [#allocation11], 4
          %s387 = int_to_ptr.vmem [resolvable:$true] %s386
          %392 = dma.hbm_to_vmem [thread:$0]  %s8, 1024, %s387, [#allocation12], 64, 64, 4
        $region40: #{tpu_custom_call.1} parent=11 // pred_fallthru
          _
        // Predicated region
        $region41: #{tpu_custom_call.1} parent=11 // pred_check
          %p393 = pneg %p249
        $region42: #{tpu_custom_call.1} parent=11 // pred_check_branch
          %395 = sbr.rel (%p393) target = $region44
        $region43: #{tpu_custom_call.1} parent=11 // pred_region
          _
        $region44: #{tpu_custom_call.1} parent=11 // pred_fallthru
          _
        // Predicated region
        $region45: #{tpu_custom_call.1} parent=11 // pred_check
          %p396 = pneg %p270
        $region46: #{tpu_custom_call.1} parent=11 // pred_check_branch
          %398 = sbr.rel (%p396) target = $region48
        $region47: #{tpu_custom_call.1} parent=11 // pred_region
          %s400 = ssub.s32 1024, 1024
          %401 = vsyncadd [#allocation12], %s400
          %s402 = sshll.u32 [#allocation13], 4
          %s403 = int_to_ptr.vmem [resolvable:$true] %s402
          %408 = dma.hbm_to_vmem [thread:$0]  %s10, 1024, %s403, [#allocation12], 64, 64, 4
        $region48: #{tpu_custom_call.1} parent=11 // pred_fallthru
          _
        // Predicated region
        $region49: #{tpu_custom_call.1} parent=11 // pred_check
          %p409 = pneg %p291
        $region50: #{tpu_custom_call.1} parent=11 // pred_check_branch
          %411 = sbr.rel (%p409) target = $region52
        $region51: #{tpu_custom_call.1} parent=11 // pred_region
          _
        $region52: #{tpu_custom_call.1} parent=11 // pred_fallthru
          _
      $region12: #{tpu_custom_call.1} parent=5 // pred_fallthru
        _
      %p412 = scmp.lt.s32.totalorder %s29, 2
      // Predicated region
      $region53: #{tpu_custom_call.1} parent=5 // pred_check
        %p413 = pneg %p412
      $region54: #{tpu_custom_call.1} parent=5 // pred_check_branch
        %415 = sbr.rel (%p413) target = $region56
      $region55: #{tpu_custom_call.1} parent=5 // pred_region
        // Predicated region
        $region57: #{tpu_custom_call.1} parent=55 // pred_check
          %p416 = pneg %p49
        $region58: #{tpu_custom_call.1} parent=55 // pred_check_branch
          %418 = sbr.rel (%p416) target = $region60
        $region59: #{tpu_custom_call.1} parent=55 // pred_region
          %s419 = sand.u32 %s39, 1
          %s420 = scalar_lea.sflag [#allocation3], %s419
          %s421 = sand.u32 %s39, 1
          %s422 = smul.addr %s421, 128
          %s423 = scalar_lea.vmem [#allocation2], %s422
          %s424 = smul.u32 16, %s29
          %s426 = ssub.s32 2048, 2048
          %427 = vsyncadd %s420, %s426
          %s428 = smul.addr %s424, 128
          %s429 = scalar_lea.hbm %s0, %s428
          %s430 = sshll.u32 %s423, 4
          %s431 = int_to_ptr.vmem [resolvable:$true] %s430
          %436 = dma.hbm_to_vmem [thread:$0]  %s429, 2048, %s431, %s420, 128, 128, 8
        $region60: #{tpu_custom_call.1} parent=55 // pred_fallthru
          _
        // Predicated region
        $region61: #{tpu_custom_call.1} parent=55 // pred_check
          %p437 = pneg %p75
        $region62: #{tpu_custom_call.1} parent=55 // pred_check_branch
          %439 = sbr.rel (%p437) target = $region64
        $region63: #{tpu_custom_call.1} parent=55 // pred_region
          %s440 = sand.u32 %s29, 1
          %s441 = scalar_lea.sflag [#allocation6], %s440
          %s442 = sand.u32 %s65, 1
          %s443 = smul.addr %s442, 128
          %s444 = scalar_lea.vmem [#allocation5], %s443
          %s445 = smul.u32 16, %s29
          %s447 = ssub.s32 2048, 2048
          %448 = vsyncadd %s441, %s447
          %s449 = smul.addr %s445, 128
          %s450 = scalar_lea.hbm %s1, %s449
          %s451 = sshll.u32 %s444, 4
          %s452 = int_to_ptr.vmem [resolvable:$true] %s451
          %457 = dma.hbm_to_vmem [thread:$0]  %s450, 2048, %s452, %s441, 128, 128, 8
        $region64: #{tpu_custom_call.1} parent=55 // pred_fallthru
          _
      $region56: #{tpu_custom_call.1} parent=5 // pred_fallthru
        _
      %p458 = scmp.le.s32.totalorder 1, %s29
      %p459 = scmp.lt.s32.totalorder %s29, 3
      %p460 = pnand %p458, %p459
      %p461 = pneg %p460
      // Predicated region
      $region65: #{tpu_custom_call.1} parent=5 // pred_check
        _
      $region66: #{tpu_custom_call.1} parent=5 // pred_check_branch
        %463 = sbr.rel (%p460) target = $region68
      $region67: #{tpu_custom_call.1} parent=5 // pred_region
        %s464 = ssub.s32 %s29, 1
        %s465 = sand.u32 %s42, 1
        %s466 = scalar_lea.sflag [#allocation3], %s465
        %s467 = sand.u32 %s42, 1
        %s468 = smul.addr %s467, 128
        %s469 = scalar_lea.vmem [#allocation2], %s468
        // Predicated region
        $region69: #{tpu_custom_call.1} parent=67 // pred_check
          %p470 = pneg %p55
        $region70: #{tpu_custom_call.1} parent=67 // pred_check_branch
          %472 = sbr.rel (%p470) target = $region72
        $region71: #{tpu_custom_call.1} parent=67 // pred_region
          %473 = dma.done %s466, 2048
        $region72: #{tpu_custom_call.1} parent=67 // pred_fallthru
          _
        %s474 = sand.u32 %s34, 1
        %s475 = scalar_lea.sflag [#allocation6], %s474
        %s476 = sand.u32 %s68, 1
        %s477 = smul.addr %s476, 128
        %s478 = scalar_lea.vmem [#allocation5], %s477
        // Predicated region
        $region73: #{tpu_custom_call.1} parent=67 // pred_check
          %p479 = pneg %p81
        $region74: #{tpu_custom_call.1} parent=67 // pred_check_branch
          %481 = sbr.rel (%p479) target = $region76
        $region75: #{tpu_custom_call.1} parent=67 // pred_region
          %482 = dma.done %s475, 2048
        $region76: #{tpu_custom_call.1} parent=67 // pred_fallthru
          _
        // Predicated region
        $region77: #{tpu_custom_call.1} parent=67 // pred_check
          %p483 = pneg %p102
        $region78: #{tpu_custom_call.1} parent=67 // pred_check_branch
          %485 = sbr.rel (%p483) target = $region80
        $region79: #{tpu_custom_call.1} parent=67 // pred_region
          %486 = dma.done [#allocation6], 1024
        $region80: #{tpu_custom_call.1} parent=67 // pred_fallthru
          _
        // Predicated region
        $region81: #{tpu_custom_call.1} parent=67 // pred_check
          %p487 = pneg %p123
        $region82: #{tpu_custom_call.1} parent=67 // pred_check_branch
          %489 = sbr.rel (%p487) target = $region84
        $region83: #{tpu_custom_call.1} parent=67 // pred_region
          %490 = dma.done [#allocation9], 1024
        $region84: #{tpu_custom_call.1} parent=67 // pred_fallthru
          _
        // Predicated region
        $region85: #{tpu_custom_call.1} parent=67 // pred_check
          %p491 = pneg %p144
        $region86: #{tpu_custom_call.1} parent=67 // pred_check_branch
          %493 = sbr.rel (%p491) target = $region88
        $region87: #{tpu_custom_call.1} parent=67 // pred_region
          %494 = dma.done [#allocation9], 1024
        $region88: #{tpu_custom_call.1} parent=67 // pred_fallthru
          _
        // Predicated region
        $region89: #{tpu_custom_call.1} parent=67 // pred_check
          %p495 = pneg %p228
        $region90: #{tpu_custom_call.1} parent=67 // pred_check_branch
          %497 = sbr.rel (%p495) target = $region92
        $region91: #{tpu_custom_call.1} parent=67 // pred_region
          %498 = dma.done [#allocation12], 1024
        $region92: #{tpu_custom_call.1} parent=67 // pred_fallthru
          _
        // Predicated region
        $region93: #{tpu_custom_call.1} parent=67 // pred_check
          %p499 = pneg %p270
        $region94: #{tpu_custom_call.1} parent=67 // pred_check_branch
          %501 = sbr.rel (%p499) target = $region96
        $region95: #{tpu_custom_call.1} parent=67 // pred_region
          %502 = dma.done [#allocation12], 1024
        $region96: #{tpu_custom_call.1} parent=67 // pred_fallthru
          _
        %s503 = sand.u32 %s42, 1
        %s504 = scalar_lea.sflag [#allocation3], %s503
        %s505 = sand.u32 %s42, 1
        %s506 = smul.addr %s505, 128
        %s507 = scalar_lea.vmem [#allocation2], %s506
        %p508 = pneg %p55
        %p509 = pneg %p52
        %s510 = sand.u32 %s34, 1
        %s511 = scalar_lea.sflag [#allocation6], %s510
        %s512 = sand.u32 %s68, 1
        %s513 = smul.addr %s512, 128
        %s514 = scalar_lea.vmem [#allocation5], %s513
        %p515 = pneg %p81
        %p516 = pneg %p78
        %p517 = pneg %p102
        %p518 = pneg %p99
        %p519 = pneg %p123
        %p520 = pneg %p120
        %p521 = pneg %p144
        %p522 = pneg %p141
        %p523 = pneg %p165
        %p524 = pneg %p162
        %p525 = pneg %p186
        %p526 = pneg %p183
        %p527 = pneg %p207
        %p528 = pneg %p204
        %p529 = pneg %p228
        %p530 = pneg %p225
        %p531 = pneg %p249
        %p532 = pneg %p246
        %p533 = pneg %p270
        %p534 = pneg %p267
        %p535 = pneg %p291
        %p536 = pneg %p288
        %p537 = pneg %p317
        %p538 = pneg %p314
        %s539 = sand.u32 %s304, 1
        %s540 = scalar_lea.sflag [#allocation4], %s539
        %s541 = sand.u32 %s304, 1
        %s542 = smul.addr %s541, 128
        %s543 = scalar_lea.vmem [#allocation14], %s542
        %s544 = smul.u32 16, %s34
        %s545 = smul.u32 16, %s34
        %s546 = smul.u32 16, %s34
        %v548 = vld [vmem:[%s469] sm:$0xff]
        %v549 = vld [vmem:[%s469 + $0x8] sm:$0xff]
        %v550 = vld [vmem:[%s469 + $0x10] sm:$0xff]
        %v551 = vld [vmem:[%s469 + $0x18] sm:$0xff]
        %v552 = vld [vmem:[%s469 + $0x20] sm:$0xff]
        %v553 = vld [vmem:[%s469 + $0x28] sm:$0xff]
        %v554 = vld [vmem:[%s469 + $0x30] sm:$0xff]
        %v555 = vld [vmem:[%s469 + $0x38] sm:$0xff]
        %v556 = vld [vmem:[%s469 + $0x40] sm:$0xff]
        %v557 = vld [vmem:[%s469 + $0x48] sm:$0xff]
        %v558 = vld [vmem:[%s469 + $0x50] sm:$0xff]
        %v559 = vld [vmem:[%s469 + $0x58] sm:$0xff]
        %v560 = vld [vmem:[%s469 + $0x60] sm:$0xff]
        %v561 = vld [vmem:[%s469 + $0x68] sm:$0xff]
        %v562 = vld [vmem:[%s469 + $0x70] sm:$0xff]
        %v563 = vld [vmem:[%s469 + $0x78] sm:$0xff]
        %v564 = vld [vmem:[%s478] sm:$0xff]
        %v565 = vld [vmem:[%s478 + $0x8] sm:$0xff]
        %v566 = vld [vmem:[%s478 + $0x10] sm:$0xff]
        %v567 = vld [vmem:[%s478 + $0x18] sm:$0xff]
        %v568 = vld [vmem:[%s478 + $0x20] sm:$0xff]
        %v569 = vld [vmem:[%s478 + $0x28] sm:$0xff]
        %v570 = vld [vmem:[%s478 + $0x30] sm:$0xff]
        %v571 = vld [vmem:[%s478 + $0x38] sm:$0xff]
        %v572 = vld [vmem:[%s478 + $0x40] sm:$0xff]
        %v573 = vld [vmem:[%s478 + $0x48] sm:$0xff]
        %v574 = vld [vmem:[%s478 + $0x50] sm:$0xff]
        %v575 = vld [vmem:[%s478 + $0x58] sm:$0xff]
        %v576 = vld [vmem:[%s478 + $0x60] sm:$0xff]
        %v577 = vld [vmem:[%s478 + $0x68] sm:$0xff]
        %v578 = vld [vmem:[%s478 + $0x70] sm:$0xff]
        %v579 = vld [vmem:[%s478 + $0x78] sm:$0xff]
        %v580 = vxor.u32 %v564, 2147483648
        %v581 = vxor.u32 %v565, 2147483648
        %v582 = vxor.u32 %v566, 2147483648
        %v583 = vxor.u32 %v567, 2147483648
        %v584 = vxor.u32 %v568, 2147483648
        %v585 = vxor.u32 %v569, 2147483648
        %v586 = vxor.u32 %v570, 2147483648
        %v587 = vxor.u32 %v571, 2147483648
        %v588 = vxor.u32 %v572, 2147483648
        %v589 = vxor.u32 %v573, 2147483648
        %v590 = vxor.u32 %v574, 2147483648
        %v591 = vxor.u32 %v575, 2147483648
        %v592 = vxor.u32 %v576, 2147483648
        %v593 = vxor.u32 %v577, 2147483648
        %v594 = vxor.u32 %v578, 2147483648
        %v595 = vxor.u32 %v579, 2147483648
        %v596 = vmul.f32 %v580, 1.442695
        %v597 = vpow.pop %v596
        %v598 = vmul.f32 %v581, 1.442695
        %v599 = vpow.pop %v598
        %v600 = vmul.f32 %v582, 1.442695
        %v601 = vpow.pop %v600
        %v602 = vmul.f32 %v583, 1.442695
        %v603 = vpow.pop %v602
        %v604 = vmul.f32 %v584, 1.442695
        %v605 = vpow.pop %v604
        %v606 = vmul.f32 %v585, 1.442695
        %v607 = vpow.pop %v606
        %v608 = vmul.f32 %v586, 1.442695
        %v609 = vpow.pop %v608
        %v610 = vmul.f32 %v587, 1.442695
        %v611 = vpow.pop %v610
        %v612 = vmul.f32 %v588, 1.442695
        %v613 = vpow.pop %v612
        %v614 = vmul.f32 %v589, 1.442695
        %v615 = vpow.pop %v614
        %v616 = vmul.f32 %v590, 1.442695
        %v617 = vpow.pop %v616
        %v618 = vmul.f32 %v591, 1.442695
        %v619 = vpow.pop %v618
        %v620 = vmul.f32 %v592, 1.442695
        %v621 = vpow.pop %v620
        %v622 = vmul.f32 %v593, 1.442695
        %v623 = vpow.pop %v622
        %v624 = vmul.f32 %v594, 1.442695
        %v625 = vpow.pop %v624
        %v626 = vmul.f32 %v595, 1.442695
        %v627 = vpow.pop %v626
        %v628 = vadd.f32 %v597, 1.0
        %v629 = vadd.f32 %v599, 1.0
        %v630 = vadd.f32 %v601, 1.0
        %v631 = vadd.f32 %v603, 1.0
        %v632 = vadd.f32 %v605, 1.0
        %v633 = vadd.f32 %v607, 1.0
        %v634 = vadd.f32 %v609, 1.0
        %v635 = vadd.f32 %v611, 1.0
        %v636 = vadd.f32 %v613, 1.0
        %v637 = vadd.f32 %v615, 1.0
        %v638 = vadd.f32 %v617, 1.0
        %v639 = vadd.f32 %v619, 1.0
        %v640 = vadd.f32 %v621, 1.0
        %v641 = vadd.f32 %v623, 1.0
        %v642 = vadd.f32 %v625, 1.0
        %v643 = vadd.f32 %v627, 1.0
        %v644 = vrcp.pop %v628
        %v645 = vmul.f32 1.0, %v644
        %v646 = vrcp.pop %v629
        %v647 = vmul.f32 1.0, %v646
        %v648 = vrcp.pop %v630
        %v649 = vmul.f32 1.0, %v648
        %v650 = vrcp.pop %v631
        %v651 = vmul.f32 1.0, %v650
        %v652 = vrcp.pop %v632
        %v653 = vmul.f32 1.0, %v652
        %v654 = vrcp.pop %v633
        %v655 = vmul.f32 1.0, %v654
        %v656 = vrcp.pop %v634
        %v657 = vmul.f32 1.0, %v656
        %v658 = vrcp.pop %v635
        %v659 = vmul.f32 1.0, %v658
        %v660 = vrcp.pop %v636
        %v661 = vmul.f32 1.0, %v660
        %v662 = vrcp.pop %v637
        %v663 = vmul.f32 1.0, %v662
        %v664 = vrcp.pop %v638
        %v665 = vmul.f32 1.0, %v664
        %v666 = vrcp.pop %v639
        %v667 = vmul.f32 1.0, %v666
        %v668 = vrcp.pop %v640
        %v669 = vmul.f32 1.0, %v668
        %v670 = vrcp.pop %v641
        %v671 = vmul.f32 1.0, %v670
        %v672 = vrcp.pop %v642
        %v673 = vmul.f32 1.0, %v672
        %v674 = vrcp.pop %v643
        %v675 = vmul.f32 1.0, %v674
        %v676 = vmul.f32 %v564, %v645
        %v677 = vmul.f32 %v565, %v647
        %v678 = vmul.f32 %v566, %v649
        %v679 = vmul.f32 %v567, %v651
        %v680 = vmul.f32 %v568, %v653
        %v681 = vmul.f32 %v569, %v655
        %v682 = vmul.f32 %v570, %v657
        %v683 = vmul.f32 %v571, %v659
        %v684 = vmul.f32 %v572, %v661
        %v685 = vmul.f32 %v573, %v663
        %v686 = vmul.f32 %v574, %v665
        %v687 = vmul.f32 %v575, %v667
        %v688 = vmul.f32 %v576, %v669
        %v689 = vmul.f32 %v577, %v671
        %v690 = vmul.f32 %v578, %v673
        %v691 = vmul.f32 %v579, %v675
        %v692 = vpack.c.bf16 %v677, %v676
        %v693 = vpack.c.bf16 %v679, %v678
        %v694 = vpack.c.bf16 %v681, %v680
        %v695 = vpack.c.bf16 %v683, %v682
        %v696 = vpack.c.bf16 %v685, %v684
        %v697 = vpack.c.bf16 %v687, %v686
        %v698 = vpack.c.bf16 %v689, %v688
        %v699 = vpack.c.bf16 %v691, %v690
        %v700 = vld [vmem:[#allocation7] sm:$0xf]
        %v701 = vld [vmem:[#allocation7 + $0x4] sm:$0xf]
        %v702 = vld [vmem:[#allocation7 + $0x8] sm:$0xf]
        %v703 = vld [vmem:[#allocation7 + $0xc] sm:$0xf]
        %v704 = vld [vmem:[#allocation7 + $0x10] sm:$0xf]
        %v705 = vld [vmem:[#allocation7 + $0x14] sm:$0xf]
        %v706 = vld [vmem:[#allocation7 + $0x18] sm:$0xf]
        %v707 = vld [vmem:[#allocation7 + $0x1c] sm:$0xf]
        %v708 = vld [vmem:[#allocation7 + $0x20] sm:$0xf]
        %v709 = vld [vmem:[#allocation7 + $0x24] sm:$0xf]
        %v710 = vld [vmem:[#allocation7 + $0x28] sm:$0xf]
        %v711 = vld [vmem:[#allocation7 + $0x2c] sm:$0xf]
        %v712 = vld [vmem:[#allocation7 + $0x30] sm:$0xf]
        %v713 = vld [vmem:[#allocation7 + $0x34] sm:$0xf]
        %v714 = vld [vmem:[#allocation7 + $0x38] sm:$0xf]
        %v715 = vld [vmem:[#allocation7 + $0x3c] sm:$0xf]
        %v716 = vld [vmem:[%s5] sm:$0x1]
        %v718 = vlaneseq
        %v719 = vshrl.u32 %v718, 7
        %v720 = vsub.s32 0, %v719
        %v721 = vrot.slane %v716, %v720
        %v739 = vunpack.c.l.b16 %v700
        %v740 = vunpack.c.l.b16 %v701
        %v741 = vunpack.c.l.b16 %v702
        %v742 = vunpack.c.l.b16 %v703
        %v743 = vunpack.c.l.b16 %v704
        %v744 = vunpack.c.l.b16 %v705
        %v745 = vunpack.c.l.b16 %v706
        %v746 = vunpack.c.l.b16 %v707
        %v747 = vunpack.c.l.b16 %v708
        %v748 = vunpack.c.l.b16 %v709
        %v749 = vunpack.c.l.b16 %v710
        %v750 = vunpack.c.l.b16 %v711
        %v751 = vunpack.c.l.b16 %v712
        %v752 = vunpack.c.l.b16 %v713
        %v753 = vunpack.c.l.b16 %v714
        %v754 = vunpack.c.l.b16 %v715
        %v755 = vpack.c.b16 %v740, %v739
        %v756 = vpack.c.b16 %v742, %v741
        %v757 = vpack.c.b16 %v744, %v743
        %v758 = vpack.c.b16 %v746, %v745
        %v759 = vpack.c.b16 %v748, %v747
        %v760 = vpack.c.b16 %v750, %v749
        %v761 = vpack.c.b16 %v752, %v751
        %v762 = vpack.c.b16 %v754, %v753
        %771 = vmatprep.subr.bf16.mxu0 0
        %772 = vmatpush1.bf16.msra.mxu0 %v762
        %773 = vmatprep.subr.bf16.mxu0 0
        %774 = vmatpush1.bf16.msra.mxu0 %v761
        %775 = vmatprep.subr.bf16.mxu0 0
        %776 = vmatpush1.bf16.msra.mxu0 %v760
        %777 = vmatprep.subr.bf16.mxu0 0
        %778 = vmatpush1.bf16.msra.mxu0 %v759
        %779 = vmatprep.subr.bf16.mxu0 0
        %780 = vmatpush1.bf16.msra.mxu0 %v758
        %781 = vmatprep.subr.bf16.mxu0 0
        %782 = vmatpush1.bf16.msra.mxu0 %v757
        %783 = vmatprep.subr.bf16.mxu0 0
        %784 = vmatpush1.bf16.msra.mxu0 %v756
        %785 = vmatprep.subr.bf16.mxu0 0
        %786 = vmatpush1.bf16.msra.mxu0 %v755
        %787 = vmatprep.subr.bf16.mxu0 0
        %788 = vmatpush2.bf16.msra.mxu0 0
        %789 = vmatprep.subr.bf16.mxu0 0
        %790 = vmatpush2.bf16.msra.mxu0 0
        %791 = vmatprep.subr.bf16.mxu0 0
        %792 = vmatpush2.bf16.msra.mxu0 0
        %793 = vmatprep.subr.bf16.mxu0 0
        %794 = vmatpush2.bf16.msra.mxu0 0
        %795 = vmatprep.subr.bf16.mxu0 0
        %796 = vmatpush2.bf16.msra.mxu0 0
        %797 = vmatprep.subr.bf16.mxu0 0
        %798 = vmatpush2.bf16.msra.mxu0 0
        %799 = vmatprep.subr.bf16.mxu0 0
        %800 = vmatpush2.bf16.msra.mxu0 0
        %801 = vmatprep.subr.bf16.mxu0 0
        %802 = vmatpush2.bf16.msra.mxu0 0
        %803 = vmatprep.mubr.bf16.mxu0 0
        %804 = vmatmul.mubr.bf16.gmra.mxu0 %v692
        %v805 = vpop.f32.mrf.mxu0
        %v806 = vadd.f32 %v721, %v805
        %v807 = vpop.f32.mrf.mxu0
        %v808 = vpop.f32.mrf.mxu0
        %v809 = vadd.f32 %v721, %v808
        %v810 = vpop.f32.mrf.mxu0
        %811 = vmatprep.mubr.bf16.mxu0 0
        %812 = vmatmul.mubr.bf16.gmra.mxu0 %v693
        %v813 = vpop.f32.mrf.mxu0
        %v814 = vadd.f32 %v721, %v813
        %v815 = vpop.f32.mrf.mxu0
        %v816 = vpop.f32.mrf.mxu0
        %v817 = vadd.f32 %v721, %v816
        %v818 = vpop.f32.mrf.mxu0
        %819 = vmatprep.mubr.bf16.mxu0 0
        %820 = vmatmul.mubr.bf16.gmra.mxu0 %v694
        %v821 = vpop.f32.mrf.mxu0
        %v822 = vadd.f32 %v721, %v821
        %v823 = vpop.f32.mrf.mxu0
        %v824 = vpop.f32.mrf.mxu0
        %v825 = vadd.f32 %v721, %v824
        %v826 = vpop.f32.mrf.mxu0
        %827 = vmatprep.mubr.bf16.mxu0 0
        %828 = vmatmul.mubr.bf16.gmra.mxu0 %v695
        %v829 = vpop.f32.mrf.mxu0
        %v830 = vadd.f32 %v721, %v829
        %v831 = vpop.f32.mrf.mxu0
        %v832 = vpop.f32.mrf.mxu0
        %v833 = vadd.f32 %v721, %v832
        %v834 = vpop.f32.mrf.mxu0
        %835 = vmatprep.mubr.bf16.mxu0 0
        %836 = vmatmul.mubr.bf16.gmra.mxu0 %v696
        %v837 = vpop.f32.mrf.mxu0
        %v838 = vadd.f32 %v721, %v837
        %v839 = vpop.f32.mrf.mxu0
        %v840 = vpop.f32.mrf.mxu0
        %v841 = vadd.f32 %v721, %v840
        %v842 = vpop.f32.mrf.mxu0
        %843 = vmatprep.mubr.bf16.mxu0 0
        %844 = vmatmul.mubr.bf16.gmra.mxu0 %v697
        %v845 = vpop.f32.mrf.mxu0
        %v846 = vadd.f32 %v721, %v845
        %v847 = vpop.f32.mrf.mxu0
        %v848 = vpop.f32.mrf.mxu0
        %v849 = vadd.f32 %v721, %v848
        %v850 = vpop.f32.mrf.mxu0
        %851 = vmatprep.mubr.bf16.mxu0 0
        %852 = vmatmul.mubr.bf16.gmra.mxu0 %v698
        %v853 = vpop.f32.mrf.mxu0
        %v854 = vadd.f32 %v721, %v853
        %v855 = vpop.f32.mrf.mxu0
        %v856 = vpop.f32.mrf.mxu0
        %v857 = vadd.f32 %v721, %v856
        %v858 = vpop.f32.mrf.mxu0
        %859 = vmatprep.mubr.bf16.mxu0 0
        %860 = vmatmul.mubr.bf16.gmra.mxu0 %v699
        %v861 = vpop.f32.mrf.mxu0
        %v862 = vadd.f32 %v721, %v861
        %v863 = vpop.f32.mrf.mxu0
        %v864 = vpop.f32.mrf.mxu0
        %v865 = vadd.f32 %v721, %v864
        %v866 = vpop.f32.mrf.mxu0
        %867 = vdwg.mxu0
        %v868 = vld [vmem:[#allocation8] sm:$0xf]
        %v869 = vld [vmem:[#allocation8 + $0x4] sm:$0xf]
        %v870 = vld [vmem:[#allocation8 + $0x8] sm:$0xf]
        %v871 = vld [vmem:[#allocation8 + $0xc] sm:$0xf]
        %v872 = vld [vmem:[#allocation8 + $0x10] sm:$0xf]
        %v873 = vld [vmem:[#allocation8 + $0x14] sm:$0xf]
        %v874 = vld [vmem:[#allocation8 + $0x18] sm:$0xf]
        %v875 = vld [vmem:[#allocation8 + $0x1c] sm:$0xf]
        %v876 = vld [vmem:[#allocation8 + $0x20] sm:$0xf]
        %v877 = vld [vmem:[#allocation8 + $0x24] sm:$0xf]
        %v878 = vld [vmem:[#allocation8 + $0x28] sm:$0xf]
        %v879 = vld [vmem:[#allocation8 + $0x2c] sm:$0xf]
        %v880 = vld [vmem:[#allocation8 + $0x30] sm:$0xf]
        %v881 = vld [vmem:[#allocation8 + $0x34] sm:$0xf]
        %v882 = vld [vmem:[#allocation8 + $0x38] sm:$0xf]
        %v883 = vld [vmem:[#allocation8 + $0x3c] sm:$0xf]
        %v884 = vld [vmem:[%s6] sm:$0x1]
        %v886 = vlaneseq
        %v887 = vshrl.u32 %v886, 7
        %v888 = vsub.s32 0, %v887
        %v889 = vrot.slane %v884, %v888
        %v907 = vunpack.c.l.b16 %v868
        %v908 = vunpack.c.l.b16 %v869
        %v909 = vunpack.c.l.b16 %v870
        %v910 = vunpack.c.l.b16 %v871
        %v911 = vunpack.c.l.b16 %v872
        %v912 = vunpack.c.l.b16 %v873
        %v913 = vunpack.c.l.b16 %v874
        %v914 = vunpack.c.l.b16 %v875
        %v915 = vunpack.c.l.b16 %v876
        %v916 = vunpack.c.l.b16 %v877
        %v917 = vunpack.c.l.b16 %v878
        %v918 = vunpack.c.l.b16 %v879
        %v919 = vunpack.c.l.b16 %v880
        %v920 = vunpack.c.l.b16 %v881
        %v921 = vunpack.c.l.b16 %v882
        %v922 = vunpack.c.l.b16 %v883
        %v923 = vpack.c.b16 %v908, %v907
        %v924 = vpack.c.b16 %v910, %v909
        %v925 = vpack.c.b16 %v912, %v911
        %v926 = vpack.c.b16 %v914, %v913
        %v927 = vpack.c.b16 %v916, %v915
        %v928 = vpack.c.b16 %v918, %v917
        %v929 = vpack.c.b16 %v920, %v919
        %v930 = vpack.c.b16 %v922, %v921
        %939 = vmatprep.subr.bf16.mxu0 0
        %940 = vmatpush1.bf16.msra.mxu0 %v930
        %941 = vmatprep.subr.bf16.mxu0 0
        %942 = vmatpush1.bf16.msra.mxu0 %v929
        %943 = vmatprep.subr.bf16.mxu0 0
        %944 = vmatpush1.bf16.msra.mxu0 %v928
        %945 = vmatprep.subr.bf16.mxu0 0
        %946 = vmatpush1.bf16.msra.mxu0 %v927
        %947 = vmatprep.subr.bf16.mxu0 0
        %948 = vmatpush1.bf16.msra.mxu0 %v926
        %949 = vmatprep.subr.bf16.mxu0 0
        %950 = vmatpush1.bf16.msra.mxu0 %v925
        %951 = vmatprep.subr.bf16.mxu0 0
        %952 = vmatpush1.bf16.msra.mxu0 %v924
        %953 = vmatprep.subr.bf16.mxu0 0
        %954 = vmatpush1.bf16.msra.mxu0 %v923
        %955 = vmatprep.subr.bf16.mxu0 0
        %956 = vmatpush2.bf16.msra.mxu0 0
        %957 = vmatprep.subr.bf16.mxu0 0
        %958 = vmatpush2.bf16.msra.mxu0 0
        %959 = vmatprep.subr.bf16.mxu0 0
        %960 = vmatpush2.bf16.msra.mxu0 0
        %961 = vmatprep.subr.bf16.mxu0 0
        %962 = vmatpush2.bf16.msra.mxu0 0
        %963 = vmatprep.subr.bf16.mxu0 0
        %964 = vmatpush2.bf16.msra.mxu0 0
        %965 = vmatprep.subr.bf16.mxu0 0
        %966 = vmatpush2.bf16.msra.mxu0 0
        %967 = vmatprep.subr.bf16.mxu0 0
        %968 = vmatpush2.bf16.msra.mxu0 0
        %969 = vmatprep.subr.bf16.mxu0 0
        %970 = vmatpush2.bf16.msra.mxu0 0
        %971 = vmatprep.mubr.bf16.mxu0 0
        %972 = vmatmul.mubr.bf16.gmra.mxu0 %v692
        %v973 = vpop.f32.mrf.mxu0
        %v974 = vadd.f32 %v889, %v973
        %v975 = vpop.f32.mrf.mxu0
        %v976 = vpop.f32.mrf.mxu0
        %v977 = vadd.f32 %v889, %v976
        %v978 = vpop.f32.mrf.mxu0
        %979 = vmatprep.mubr.bf16.mxu0 0
        %980 = vmatmul.mubr.bf16.gmra.mxu0 %v693
        %v981 = vpop.f32.mrf.mxu0
        %v982 = vadd.f32 %v889, %v981
        %v983 = vpop.f32.mrf.mxu0
        %v984 = vpop.f32.mrf.mxu0
        %v985 = vadd.f32 %v889, %v984
        %v986 = vpop.f32.mrf.mxu0
        %987 = vmatprep.mubr.bf16.mxu0 0
        %988 = vmatmul.mubr.bf16.gmra.mxu0 %v694
        %v989 = vpop.f32.mrf.mxu0
        %v990 = vadd.f32 %v889, %v989
        %v991 = vpop.f32.mrf.mxu0
        %v992 = vpop.f32.mrf.mxu0
        %v993 = vadd.f32 %v889, %v992
        %v994 = vpop.f32.mrf.mxu0
        %995 = vmatprep.mubr.bf16.mxu0 0
        %996 = vmatmul.mubr.bf16.gmra.mxu0 %v695
        %v997 = vpop.f32.mrf.mxu0
        %v998 = vadd.f32 %v889, %v997
        %v999 = vpop.f32.mrf.mxu0
        %v1000 = vpop.f32.mrf.mxu0
        %v1001 = vadd.f32 %v889, %v1000
        %v1002 = vpop.f32.mrf.mxu0
        %1003 = vmatprep.mubr.bf16.mxu0 0
        %1004 = vmatmul.mubr.bf16.gmra.mxu0 %v696
        %v1005 = vpop.f32.mrf.mxu0
        %v1006 = vadd.f32 %v889, %v1005
        %v1007 = vpop.f32.mrf.mxu0
        %v1008 = vpop.f32.mrf.mxu0
        %v1009 = vadd.f32 %v889, %v1008
        %v1010 = vpop.f32.mrf.mxu0
        %1011 = vmatprep.mubr.bf16.mxu0 0
        %1012 = vmatmul.mubr.bf16.gmra.mxu0 %v697
        %v1013 = vpop.f32.mrf.mxu0
        %v1014 = vadd.f32 %v889, %v1013
        %v1015 = vpop.f32.mrf.mxu0
        %v1016 = vpop.f32.mrf.mxu0
        %v1017 = vadd.f32 %v889, %v1016
        %v1018 = vpop.f32.mrf.mxu0
        %1019 = vmatprep.mubr.bf16.mxu0 0
        %1020 = vmatmul.mubr.bf16.gmra.mxu0 %v698
        %v1021 = vpop.f32.mrf.mxu0
        %v1022 = vadd.f32 %v889, %v1021
        %v1023 = vpop.f32.mrf.mxu0
        %v1024 = vpop.f32.mrf.mxu0
        %v1025 = vadd.f32 %v889, %v1024
        %v1026 = vpop.f32.mrf.mxu0
        %1027 = vmatprep.mubr.bf16.mxu0 0
        %1028 = vmatmul.mubr.bf16.gmra.mxu0 %v699
        %v1029 = vpop.f32.mrf.mxu0
        %v1030 = vadd.f32 %v889, %v1029
        %v1031 = vpop.f32.mrf.mxu0
        %v1032 = vpop.f32.mrf.mxu0
        %v1033 = vadd.f32 %v889, %v1032
        %v1034 = vpop.f32.mrf.mxu0
        %1035 = vdwg.mxu0
        %v1036 = vld [vmem:[#allocation10] sm:$0xf]
        %v1037 = vld [vmem:[#allocation10 + $0x4] sm:$0xf]
        %v1038 = vld [vmem:[#allocation10 + $0x8] sm:$0xf]
        %v1039 = vld [vmem:[#allocation10 + $0xc] sm:$0xf]
        %v1040 = vld [vmem:[#allocation10 + $0x10] sm:$0xf]
        %v1041 = vld [vmem:[#allocation10 + $0x14] sm:$0xf]
        %v1042 = vld [vmem:[#allocation10 + $0x18] sm:$0xf]
        %v1043 = vld [vmem:[#allocation10 + $0x1c] sm:$0xf]
        %v1044 = vld [vmem:[#allocation10 + $0x20] sm:$0xf]
        %v1045 = vld [vmem:[#allocation10 + $0x24] sm:$0xf]
        %v1046 = vld [vmem:[#allocation10 + $0x28] sm:$0xf]
        %v1047 = vld [vmem:[#allocation10 + $0x2c] sm:$0xf]
        %v1048 = vld [vmem:[#allocation10 + $0x30] sm:$0xf]
        %v1049 = vld [vmem:[#allocation10 + $0x34] sm:$0xf]
        %v1050 = vld [vmem:[#allocation10 + $0x38] sm:$0xf]
        %v1051 = vld [vmem:[#allocation10 + $0x3c] sm:$0xf]
        %v1052 = vld [vmem:[%s7] sm:$0x1]
        %v1054 = vlaneseq
        %v1055 = vshrl.u32 %v1054, 7
        %v1056 = vsub.s32 0, %v1055
        %v1057 = vrot.slane %v1052, %v1056
        %v1075 = vunpack.c.l.b16 %v1036
        %v1076 = vunpack.c.l.b16 %v1037
        %v1077 = vunpack.c.l.b16 %v1038
        %v1078 = vunpack.c.l.b16 %v1039
        %v1079 = vunpack.c.l.b16 %v1040
        %v1080 = vunpack.c.l.b16 %v1041
        %v1081 = vunpack.c.l.b16 %v1042
        %v1082 = vunpack.c.l.b16 %v1043
        %v1083 = vunpack.c.l.b16 %v1044
        %v1084 = vunpack.c.l.b16 %v1045
        %v1085 = vunpack.c.l.b16 %v1046
        %v1086 = vunpack.c.l.b16 %v1047
        %v1087 = vunpack.c.l.b16 %v1048
        %v1088 = vunpack.c.l.b16 %v1049
        %v1089 = vunpack.c.l.b16 %v1050
        %v1090 = vunpack.c.l.b16 %v1051
        %v1091 = vpack.c.b16 %v1076, %v1075
        %v1092 = vpack.c.b16 %v1078, %v1077
        %v1093 = vpack.c.b16 %v1080, %v1079
        %v1094 = vpack.c.b16 %v1082, %v1081
        %v1095 = vpack.c.b16 %v1084, %v1083
        %v1096 = vpack.c.b16 %v1086, %v1085
        %v1097 = vpack.c.b16 %v1088, %v1087
        %v1098 = vpack.c.b16 %v1090, %v1089
        %1107 = vmatprep.subr.bf16.mxu0 0
        %1108 = vmatpush1.bf16.msra.mxu0 %v1098
        %1109 = vmatprep.subr.bf16.mxu0 0
        %1110 = vmatpush1.bf16.msra.mxu0 %v1097
        %1111 = vmatprep.subr.bf16.mxu0 0
        %1112 = vmatpush1.bf16.msra.mxu0 %v1096
        %1113 = vmatprep.subr.bf16.mxu0 0
        %1114 = vmatpush1.bf16.msra.mxu0 %v1095
        %1115 = vmatprep.subr.bf16.mxu0 0
        %1116 = vmatpush1.bf16.msra.mxu0 %v1094
        %1117 = vmatprep.subr.bf16.mxu0 0
        %1118 = vmatpush1.bf16.msra.mxu0 %v1093
        %1119 = vmatprep.subr.bf16.mxu0 0
        %1120 = vmatpush1.bf16.msra.mxu0 %v1092
        %1121 = vmatprep.subr.bf16.mxu0 0
        %1122 = vmatpush1.bf16.msra.mxu0 %v1091
        %1123 = vmatprep.subr.bf16.mxu0 0
        %1124 = vmatpush2.bf16.msra.mxu0 0
        %1125 = vmatprep.subr.bf16.mxu0 0
        %1126 = vmatpush2.bf16.msra.mxu0 0
        %1127 = vmatprep.subr.bf16.mxu0 0
        %1128 = vmatpush2.bf16.msra.mxu0 0
        %1129 = vmatprep.subr.bf16.mxu0 0
        %1130 = vmatpush2.bf16.msra.mxu0 0
        %1131 = vmatprep.subr.bf16.mxu0 0
        %1132 = vmatpush2.bf16.msra.mxu0 0
        %1133 = vmatprep.subr.bf16.mxu0 0
        %1134 = vmatpush2.bf16.msra.mxu0 0
        %1135 = vmatprep.subr.bf16.mxu0 0
        %1136 = vmatpush2.bf16.msra.mxu0 0
        %1137 = vmatprep.subr.bf16.mxu0 0
        %1138 = vmatpush2.bf16.msra.mxu0 0
        %1139 = vmatprep.mubr.bf16.mxu0 0
        %1140 = vmatmul.mubr.bf16.gmra.mxu0 %v692
        %v1141 = vpop.f32.mrf.mxu0
        %v1142 = vadd.f32 %v1057, %v1141
        %v1143 = vpop.f32.mrf.mxu0
        %v1144 = vpop.f32.mrf.mxu0
        %v1145 = vadd.f32 %v1057, %v1144
        %v1146 = vpop.f32.mrf.mxu0
        %1147 = vmatprep.mubr.bf16.mxu0 0
        %1148 = vmatmul.mubr.bf16.gmra.mxu0 %v693
        %v1149 = vpop.f32.mrf.mxu0
        %v1150 = vadd.f32 %v1057, %v1149
        %v1151 = vpop.f32.mrf.mxu0
        %v1152 = vpop.f32.mrf.mxu0
        %v1153 = vadd.f32 %v1057, %v1152
        %v1154 = vpop.f32.mrf.mxu0
        %1155 = vmatprep.mubr.bf16.mxu0 0
        %1156 = vmatmul.mubr.bf16.gmra.mxu0 %v694
        %v1157 = vpop.f32.mrf.mxu0
        %v1158 = vadd.f32 %v1057, %v1157
        %v1159 = vpop.f32.mrf.mxu0
        %v1160 = vpop.f32.mrf.mxu0
        %v1161 = vadd.f32 %v1057, %v1160
        %v1162 = vpop.f32.mrf.mxu0
        %1163 = vmatprep.mubr.bf16.mxu0 0
        %1164 = vmatmul.mubr.bf16.gmra.mxu0 %v695
        %v1165 = vpop.f32.mrf.mxu0
        %v1166 = vadd.f32 %v1057, %v1165
        %v1167 = vpop.f32.mrf.mxu0
        %v1168 = vpop.f32.mrf.mxu0
        %v1169 = vadd.f32 %v1057, %v1168
        %v1170 = vpop.f32.mrf.mxu0
        %1171 = vmatprep.mubr.bf16.mxu0 0
        %1172 = vmatmul.mubr.bf16.gmra.mxu0 %v696
        %v1173 = vpop.f32.mrf.mxu0
        %v1174 = vadd.f32 %v1057, %v1173
        %v1175 = vpop.f32.mrf.mxu0
        %v1176 = vpop.f32.mrf.mxu0
        %v1177 = vadd.f32 %v1057, %v1176
        %v1178 = vpop.f32.mrf.mxu0
        %1179 = vmatprep.mubr.bf16.mxu0 0
        %1180 = vmatmul.mubr.bf16.gmra.mxu0 %v697
        %v1181 = vpop.f32.mrf.mxu0
        %v1182 = vadd.f32 %v1057, %v1181
        %v1183 = vpop.f32.mrf.mxu0
        %v1184 = vpop.f32.mrf.mxu0
        %v1185 = vadd.f32 %v1057, %v1184
        %v1186 = vpop.f32.mrf.mxu0
        %1187 = vmatprep.mubr.bf16.mxu0 0
        %1188 = vmatmul.mubr.bf16.gmra.mxu0 %v698
        %v1189 = vpop.f32.mrf.mxu0
        %v1190 = vadd.f32 %v1057, %v1189
        %v1191 = vpop.f32.mrf.mxu0
        %v1192 = vpop.f32.mrf.mxu0
        %v1193 = vadd.f32 %v1057, %v1192
        %v1194 = vpop.f32.mrf.mxu0
        %1195 = vmatprep.mubr.bf16.mxu0 0
        %1196 = vmatmul.mubr.bf16.gmra.mxu0 %v699
        %v1197 = vpop.f32.mrf.mxu0
        %v1198 = vadd.f32 %v1057, %v1197
        %v1199 = vpop.f32.mrf.mxu0
        %v1200 = vpop.f32.mrf.mxu0
        %v1201 = vadd.f32 %v1057, %v1200
        %v1202 = vpop.f32.mrf.mxu0
        %1203 = vdwg.mxu0
        %1204 = vadd.xlane.f32.xlu0 %v548
        %v1205 = vpop.xlane.xlu0 %1204
        %1206 = vadd.xlane.f32.xlu0 %v549
        %v1207 = vpop.xlane.xlu0 %1206
        %1208 = vadd.xlane.f32.xlu0 %v550
        %v1209 = vpop.xlane.xlu0 %1208
        %1210 = vadd.xlane.f32.xlu0 %v551
        %v1211 = vpop.xlane.xlu0 %1210
        %1212 = vadd.xlane.f32.xlu0 %v552
        %v1213 = vpop.xlane.xlu0 %1212
        %1214 = vadd.xlane.f32.xlu0 %v553
        %v1215 = vpop.xlane.xlu0 %1214
        %1216 = vadd.xlane.f32.xlu0 %v554
        %v1217 = vpop.xlane.xlu0 %1216
        %1218 = vadd.xlane.f32.xlu0 %v555
        %v1219 = vpop.xlane.xlu0 %1218
        %1220 = vadd.xlane.f32.xlu0 %v556
        %v1221 = vpop.xlane.xlu0 %1220
        %1222 = vadd.xlane.f32.xlu0 %v557
        %v1223 = vpop.xlane.xlu0 %1222
        %1224 = vadd.xlane.f32.xlu0 %v558
        %v1225 = vpop.xlane.xlu0 %1224
        %1226 = vadd.xlane.f32.xlu0 %v559
        %v1227 = vpop.xlane.xlu0 %1226
        %1228 = vadd.xlane.f32.xlu0 %v560
        %v1229 = vpop.xlane.xlu0 %1228
        %1230 = vadd.xlane.f32.xlu0 %v561
        %v1231 = vpop.xlane.xlu0 %1230
        %1232 = vadd.xlane.f32.xlu0 %v562
        %v1233 = vpop.xlane.xlu0 %1232
        %1234 = vadd.xlane.f32.xlu0 %v563
        %v1235 = vpop.xlane.xlu0 %1234
        %v1236 = vrcp.pop 128.0
        %v1237 = vmul.f32 %v1205, %v1236
        %v1238 = vmul.f32 %v1207, %v1236
        %v1239 = vmul.f32 %v1209, %v1236
        %v1240 = vmul.f32 %v1211, %v1236
        %v1241 = vmul.f32 %v1213, %v1236
        %v1242 = vmul.f32 %v1215, %v1236
        %v1243 = vmul.f32 %v1217, %v1236
        %v1244 = vmul.f32 %v1219, %v1236
        %v1245 = vmul.f32 %v1221, %v1236
        %v1246 = vmul.f32 %v1223, %v1236
        %v1247 = vmul.f32 %v1225, %v1236
        %v1248 = vmul.f32 %v1227, %v1236
        %v1249 = vmul.f32 %v1229, %v1236
        %v1250 = vmul.f32 %v1231, %v1236
        %v1251 = vmul.f32 %v1233, %v1236
        %v1252 = vmul.f32 %v1235, %v1236
        %v1253 = vsub.f32 %v548, %v1237
        %v1254 = vsub.f32 %v549, %v1238
        %v1255 = vsub.f32 %v550, %v1239
        %v1256 = vsub.f32 %v551, %v1240
        %v1257 = vsub.f32 %v552, %v1241
        %v1258 = vsub.f32 %v553, %v1242
        %v1259 = vsub.f32 %v554, %v1243
        %v1260 = vsub.f32 %v555, %v1244
        %v1261 = vsub.f32 %v556, %v1245
        %v1262 = vsub.f32 %v557, %v1246
        %v1263 = vsub.f32 %v558, %v1247
        %v1264 = vsub.f32 %v559, %v1248
        %v1265 = vsub.f32 %v560, %v1249
        %v1266 = vsub.f32 %v561, %v1250
        %v1267 = vsub.f32 %v562, %v1251
        %v1268 = vsub.f32 %v563, %v1252
        %v1269 = vmul.f32 %v1253, %v1253
        %v1270 = vmul.f32 %v1254, %v1254
        %v1271 = vmul.f32 %v1255, %v1255
        %v1272 = vmul.f32 %v1256, %v1256
        %v1273 = vmul.f32 %v1257, %v1257
        %v1274 = vmul.f32 %v1258, %v1258
        %v1275 = vmul.f32 %v1259, %v1259
        %v1276 = vmul.f32 %v1260, %v1260
        %v1277 = vmul.f32 %v1261, %v1261
        %v1278 = vmul.f32 %v1262, %v1262
        %v1279 = vmul.f32 %v1263, %v1263
        %v1280 = vmul.f32 %v1264, %v1264
        %v1281 = vmul.f32 %v1265, %v1265
        %v1282 = vmul.f32 %v1266, %v1266
        %v1283 = vmul.f32 %v1267, %v1267
        %v1284 = vmul.f32 %v1268, %v1268
        %1285 = vadd.xlane.f32.xlu0 %v1269
        %v1286 = vpop.xlane.xlu0 %1285
        %1287 = vadd.xlane.f32.xlu0 %v1270
        %v1288 = vpop.xlane.xlu0 %1287
        %1289 = vadd.xlane.f32.xlu0 %v1271
        %v1290 = vpop.xlane.xlu0 %1289
        %1291 = vadd.xlane.f32.xlu0 %v1272
        %v1292 = vpop.xlane.xlu0 %1291
        %1293 = vadd.xlane.f32.xlu0 %v1273
        %v1294 = vpop.xlane.xlu0 %1293
        %1295 = vadd.xlane.f32.xlu0 %v1274
        %v1296 = vpop.xlane.xlu0 %1295
        %1297 = vadd.xlane.f32.xlu0 %v1275
        %v1298 = vpop.xlane.xlu0 %1297
        %1299 = vadd.xlane.f32.xlu0 %v1276
        %v1300 = vpop.xlane.xlu0 %1299
        %1301 = vadd.xlane.f32.xlu0 %v1277
        %v1302 = vpop.xlane.xlu0 %1301
        %1303 = vadd.xlane.f32.xlu0 %v1278
        %v1304 = vpop.xlane.xlu0 %1303
        %1305 = vadd.xlane.f32.xlu0 %v1279
        %v1306 = vpop.xlane.xlu0 %1305
        %1307 = vadd.xlane.f32.xlu0 %v1280
        %v1308 = vpop.xlane.xlu0 %1307
        %1309 = vadd.xlane.f32.xlu0 %v1281
        %v1310 = vpop.xlane.xlu0 %1309
        %1311 = vadd.xlane.f32.xlu0 %v1282
        %v1312 = vpop.xlane.xlu0 %1311
        %1313 = vadd.xlane.f32.xlu0 %v1283
        %v1314 = vpop.xlane.xlu0 %1313
        %1315 = vadd.xlane.f32.xlu0 %v1284
        %v1316 = vpop.xlane.xlu0 %1315
        %v1317 = vmul.f32 %v1286, %v1236
        %v1318 = vmul.f32 %v1288, %v1236
        %v1319 = vmul.f32 %v1290, %v1236
        %v1320 = vmul.f32 %v1292, %v1236
        %v1321 = vmul.f32 %v1294, %v1236
        %v1322 = vmul.f32 %v1296, %v1236
        %v1323 = vmul.f32 %v1298, %v1236
        %v1324 = vmul.f32 %v1300, %v1236
        %v1325 = vmul.f32 %v1302, %v1236
        %v1326 = vmul.f32 %v1304, %v1236
        %v1327 = vmul.f32 %v1306, %v1236
        %v1328 = vmul.f32 %v1308, %v1236
        %v1329 = vmul.f32 %v1310, %v1236
        %v1330 = vmul.f32 %v1312, %v1236
        %v1331 = vmul.f32 %v1314, %v1236
        %v1332 = vmul.f32 %v1316, %v1236
        %v1333 = vadd.f32 %v1317, 1e-06
        %v1334 = vadd.f32 %v1318, 1e-06
        %v1335 = vadd.f32 %v1319, 1e-06
        %v1336 = vadd.f32 %v1320, 1e-06
        %v1337 = vadd.f32 %v1321, 1e-06
        %v1338 = vadd.f32 %v1322, 1e-06
        %v1339 = vadd.f32 %v1323, 1e-06
        %v1340 = vadd.f32 %v1324, 1e-06
        %v1341 = vadd.f32 %v1325, 1e-06
        %v1342 = vadd.f32 %v1326, 1e-06
        %v1343 = vadd.f32 %v1327, 1e-06
        %v1344 = vadd.f32 %v1328, 1e-06
        %v1345 = vadd.f32 %v1329, 1e-06
        %v1346 = vadd.f32 %v1330, 1e-06
        %v1347 = vadd.f32 %v1331, 1e-06
        %v1348 = vadd.f32 %v1332, 1e-06
        %v1349 = vrsqrt.pop %v1333
        %v1350 = vrsqrt.pop %v1334
        %v1351 = vrsqrt.pop %v1335
        %v1352 = vrsqrt.pop %v1336
        %v1353 = vrsqrt.pop %v1337
        %v1354 = vrsqrt.pop %v1338
        %v1355 = vrsqrt.pop %v1339
        %v1356 = vrsqrt.pop %v1340
        %v1357 = vrsqrt.pop %v1341
        %v1358 = vrsqrt.pop %v1342
        %v1359 = vrsqrt.pop %v1343
        %v1360 = vrsqrt.pop %v1344
        %v1361 = vrsqrt.pop %v1345
        %v1362 = vrsqrt.pop %v1346
        %v1363 = vrsqrt.pop %v1347
        %v1364 = vrsqrt.pop %v1348
        %v1365 = vmul.f32 %v1253, %v1349
        %v1366 = vmul.f32 %v1254, %v1350
        %v1367 = vmul.f32 %v1255, %v1351
        %v1368 = vmul.f32 %v1256, %v1352
        %v1369 = vmul.f32 %v1257, %v1353
        %v1370 = vmul.f32 %v1258, %v1354
        %v1371 = vmul.f32 %v1259, %v1355
        %v1372 = vmul.f32 %v1260, %v1356
        %v1373 = vmul.f32 %v1261, %v1357
        %v1374 = vmul.f32 %v1262, %v1358
        %v1375 = vmul.f32 %v1263, %v1359
        %v1376 = vmul.f32 %v1264, %v1360
        %v1377 = vmul.f32 %v1265, %v1361
        %v1378 = vmul.f32 %v1266, %v1362
        %v1379 = vmul.f32 %v1267, %v1363
        %v1380 = vmul.f32 %v1268, %v1364
        %v1381 = vadd.f32 %v974, 1.0
        %v1382 = vadd.f32 %v977, 1.0
        %v1383 = vadd.f32 %v982, 1.0
        %v1384 = vadd.f32 %v985, 1.0
        %v1385 = vadd.f32 %v990, 1.0
        %v1386 = vadd.f32 %v993, 1.0
        %v1387 = vadd.f32 %v998, 1.0
        %v1388 = vadd.f32 %v1001, 1.0
        %v1389 = vadd.f32 %v1006, 1.0
        %v1390 = vadd.f32 %v1009, 1.0
        %v1391 = vadd.f32 %v1014, 1.0
        %v1392 = vadd.f32 %v1017, 1.0
        %v1393 = vadd.f32 %v1022, 1.0
        %v1394 = vadd.f32 %v1025, 1.0
        %v1395 = vadd.f32 %v1030, 1.0
        %v1396 = vadd.f32 %v1033, 1.0
        %v1397 = vmul.f32 %v1365, %v1381
        %v1398 = vmul.f32 %v1366, %v1382
        %v1399 = vmul.f32 %v1367, %v1383
        %v1400 = vmul.f32 %v1368, %v1384
        %v1401 = vmul.f32 %v1369, %v1385
        %v1402 = vmul.f32 %v1370, %v1386
        %v1403 = vmul.f32 %v1371, %v1387
        %v1404 = vmul.f32 %v1372, %v1388
        %v1405 = vmul.f32 %v1373, %v1389
        %v1406 = vmul.f32 %v1374, %v1390
        %v1407 = vmul.f32 %v1375, %v1391
        %v1408 = vmul.f32 %v1376, %v1392
        %v1409 = vmul.f32 %v1377, %v1393
        %v1410 = vmul.f32 %v1378, %v1394
        %v1411 = vmul.f32 %v1379, %v1395
        %v1412 = vmul.f32 %v1380, %v1396
        %v1413 = vadd.f32 %v1397, %v806
        %v1414 = vadd.f32 %v1398, %v809
        %v1415 = vadd.f32 %v1399, %v814
        %v1416 = vadd.f32 %v1400, %v817
        %v1417 = vadd.f32 %v1401, %v822
        %v1418 = vadd.f32 %v1402, %v825
        %v1419 = vadd.f32 %v1403, %v830
        %v1420 = vadd.f32 %v1404, %v833
        %v1421 = vadd.f32 %v1405, %v838
        %v1422 = vadd.f32 %v1406, %v841
        %v1423 = vadd.f32 %v1407, %v846
        %v1424 = vadd.f32 %v1408, %v849
        %v1425 = vadd.f32 %v1409, %v854
        %v1426 = vadd.f32 %v1410, %v857
        %v1427 = vadd.f32 %v1411, %v862
        %v1428 = vadd.f32 %v1412, %v865
        %v1429 = vpack.c.bf16 %v1414, %v1413
        %v1430 = vpack.c.bf16 %v1416, %v1415
        %v1431 = vpack.c.bf16 %v1418, %v1417
        %v1432 = vpack.c.bf16 %v1420, %v1419
        %v1433 = vpack.c.bf16 %v1422, %v1421
        %v1434 = vpack.c.bf16 %v1424, %v1423
        %v1435 = vpack.c.bf16 %v1426, %v1425
        %v1436 = vpack.c.bf16 %v1428, %v1427
        %v1437 = vld [vmem:[#allocation11] sm:$0xf]
        %v1438 = vld [vmem:[#allocation11 + $0x4] sm:$0xf]
        %v1439 = vld [vmem:[#allocation11 + $0x8] sm:$0xf]
        %v1440 = vld [vmem:[#allocation11 + $0xc] sm:$0xf]
        %v1441 = vld [vmem:[#allocation11 + $0x10] sm:$0xf]
        %v1442 = vld [vmem:[#allocation11 + $0x14] sm:$0xf]
        %v1443 = vld [vmem:[#allocation11 + $0x18] sm:$0xf]
        %v1444 = vld [vmem:[#allocation11 + $0x1c] sm:$0xf]
        %v1445 = vld [vmem:[#allocation11 + $0x20] sm:$0xf]
        %v1446 = vld [vmem:[#allocation11 + $0x24] sm:$0xf]
        %v1447 = vld [vmem:[#allocation11 + $0x28] sm:$0xf]
        %v1448 = vld [vmem:[#allocation11 + $0x2c] sm:$0xf]
        %v1449 = vld [vmem:[#allocation11 + $0x30] sm:$0xf]
        %v1450 = vld [vmem:[#allocation11 + $0x34] sm:$0xf]
        %v1451 = vld [vmem:[#allocation11 + $0x38] sm:$0xf]
        %v1452 = vld [vmem:[#allocation11 + $0x3c] sm:$0xf]
        %v1453 = vld [vmem:[%s9] sm:$0x1]
        %v1455 = vlaneseq
        %v1456 = vshrl.u32 %v1455, 7
        %v1457 = vsub.s32 0, %v1456
        %v1458 = vrot.slane %v1453, %v1457
        %v1476 = vunpack.c.l.b16 %v1437
        %v1477 = vunpack.c.l.b16 %v1438
        %v1478 = vunpack.c.l.b16 %v1439
        %v1479 = vunpack.c.l.b16 %v1440
        %v1480 = vunpack.c.l.b16 %v1441
        %v1481 = vunpack.c.l.b16 %v1442
        %v1482 = vunpack.c.l.b16 %v1443
        %v1483 = vunpack.c.l.b16 %v1444
        %v1484 = vunpack.c.l.b16 %v1445
        %v1485 = vunpack.c.l.b16 %v1446
        %v1486 = vunpack.c.l.b16 %v1447
        %v1487 = vunpack.c.l.b16 %v1448
        %v1488 = vunpack.c.l.b16 %v1449
        %v1489 = vunpack.c.l.b16 %v1450
        %v1490 = vunpack.c.l.b16 %v1451
        %v1491 = vunpack.c.l.b16 %v1452
        %v1492 = vpack.c.b16 %v1477, %v1476
        %v1493 = vpack.c.b16 %v1479, %v1478
        %v1494 = vpack.c.b16 %v1481, %v1480
        %v1495 = vpack.c.b16 %v1483, %v1482
        %v1496 = vpack.c.b16 %v1485, %v1484
        %v1497 = vpack.c.b16 %v1487, %v1486
        %v1498 = vpack.c.b16 %v1489, %v1488
        %v1499 = vpack.c.b16 %v1491, %v1490
        %1508 = vmatprep.subr.bf16.mxu0 0
        %1509 = vmatpush1.bf16.msra.mxu0 %v1499
        %1510 = vmatprep.subr.bf16.mxu0 0
        %1511 = vmatpush1.bf16.msra.mxu0 %v1498
        %1512 = vmatprep.subr.bf16.mxu0 0
        %1513 = vmatpush1.bf16.msra.mxu0 %v1497
        %1514 = vmatprep.subr.bf16.mxu0 0
        %1515 = vmatpush1.bf16.msra.mxu0 %v1496
        %1516 = vmatprep.subr.bf16.mxu0 0
        %1517 = vmatpush1.bf16.msra.mxu0 %v1495
        %1518 = vmatprep.subr.bf16.mxu0 0
        %1519 = vmatpush1.bf16.msra.mxu0 %v1494
        %1520 = vmatprep.subr.bf16.mxu0 0
        %1521 = vmatpush1.bf16.msra.mxu0 %v1493
        %1522 = vmatprep.subr.bf16.mxu0 0
        %1523 = vmatpush1.bf16.msra.mxu0 %v1492
        %1524 = vmatprep.subr.bf16.mxu0 0
        %1525 = vmatpush2.bf16.msra.mxu0 0
        %1526 = vmatprep.subr.bf16.mxu0 0
        %1527 = vmatpush2.bf16.msra.mxu0 0
        %1528 = vmatprep.subr.bf16.mxu0 0
        %1529 = vmatpush2.bf16.msra.mxu0 0
        %1530 = vmatprep.subr.bf16.mxu0 0
        %1531 = vmatpush2.bf16.msra.mxu0 0
        %1532 = vmatprep.subr.bf16.mxu0 0
        %1533 = vmatpush2.bf16.msra.mxu0 0
        %1534 = vmatprep.subr.bf16.mxu0 0
        %1535 = vmatpush2.bf16.msra.mxu0 0
        %1536 = vmatprep.subr.bf16.mxu0 0
        %1537 = vmatpush2.bf16.msra.mxu0 0
        %1538 = vmatprep.subr.bf16.mxu0 0
        %1539 = vmatpush2.bf16.msra.mxu0 0
        %1540 = vmatprep.mubr.bf16.mxu0 0
        %1541 = vmatmul.mubr.bf16.gmra.mxu0 %v1429
        %v1542 = vpop.f32.mrf.mxu0
        %v1543 = vadd.f32 %v1458, %v1542
        %v1544 = vpop.f32.mrf.mxu0
        %v1545 = vpop.f32.mrf.mxu0
        %v1546 = vadd.f32 %v1458, %v1545
        %v1547 = vpop.f32.mrf.mxu0
        %1548 = vmatprep.mubr.bf16.mxu0 0
        %1549 = vmatmul.mubr.bf16.gmra.mxu0 %v1430
        %v1550 = vpop.f32.mrf.mxu0
        %v1551 = vadd.f32 %v1458, %v1550
        %v1552 = vpop.f32.mrf.mxu0
        %v1553 = vpop.f32.mrf.mxu0
        %v1554 = vadd.f32 %v1458, %v1553
        %v1555 = vpop.f32.mrf.mxu0
        %1556 = vmatprep.mubr.bf16.mxu0 0
        %1557 = vmatmul.mubr.bf16.gmra.mxu0 %v1431
        %v1558 = vpop.f32.mrf.mxu0
        %v1559 = vadd.f32 %v1458, %v1558
        %v1560 = vpop.f32.mrf.mxu0
        %v1561 = vpop.f32.mrf.mxu0
        %v1562 = vadd.f32 %v1458, %v1561
        %v1563 = vpop.f32.mrf.mxu0
        %1564 = vmatprep.mubr.bf16.mxu0 0
        %1565 = vmatmul.mubr.bf16.gmra.mxu0 %v1432
        %v1566 = vpop.f32.mrf.mxu0
        %v1567 = vadd.f32 %v1458, %v1566
        %v1568 = vpop.f32.mrf.mxu0
        %v1569 = vpop.f32.mrf.mxu0
        %v1570 = vadd.f32 %v1458, %v1569
        %v1571 = vpop.f32.mrf.mxu0
        %1572 = vmatprep.mubr.bf16.mxu0 0
        %1573 = vmatmul.mubr.bf16.gmra.mxu0 %v1433
        %v1574 = vpop.f32.mrf.mxu0
        %v1575 = vadd.f32 %v1458, %v1574
        %v1576 = vpop.f32.mrf.mxu0
        %v1577 = vpop.f32.mrf.mxu0
        %v1578 = vadd.f32 %v1458, %v1577
        %v1579 = vpop.f32.mrf.mxu0
        %1580 = vmatprep.mubr.bf16.mxu0 0
        %1581 = vmatmul.mubr.bf16.gmra.mxu0 %v1434
        %v1582 = vpop.f32.mrf.mxu0
        %v1583 = vadd.f32 %v1458, %v1582
        %v1584 = vpop.f32.mrf.mxu0
        %v1585 = vpop.f32.mrf.mxu0
        %v1586 = vadd.f32 %v1458, %v1585
        %v1587 = vpop.f32.mrf.mxu0
        %1588 = vmatprep.mubr.bf16.mxu0 0
        %1589 = vmatmul.mubr.bf16.gmra.mxu0 %v1435
        %v1590 = vpop.f32.mrf.mxu0
        %v1591 = vadd.f32 %v1458, %v1590
        %v1592 = vpop.f32.mrf.mxu0
        %v1593 = vpop.f32.mrf.mxu0
        %v1594 = vadd.f32 %v1458, %v1593
        %v1595 = vpop.f32.mrf.mxu0
        %1596 = vmatprep.mubr.bf16.mxu0 0
        %1597 = vmatmul.mubr.bf16.gmra.mxu0 %v1436
        %v1598 = vpop.f32.mrf.mxu0
        %v1599 = vadd.f32 %v1458, %v1598
        %v1600 = vpop.f32.mrf.mxu0
        %v1601 = vpop.f32.mrf.mxu0
        %v1602 = vadd.f32 %v1458, %v1601
        %v1603 = vpop.f32.mrf.mxu0
        %1604 = vdwg.mxu0
        %v1605 = vxor.u32 %v1543, 2147483648
        %v1606 = vxor.u32 %v1546, 2147483648
        %v1607 = vxor.u32 %v1551, 2147483648
        %v1608 = vxor.u32 %v1554, 2147483648
        %v1609 = vxor.u32 %v1559, 2147483648
        %v1610 = vxor.u32 %v1562, 2147483648
        %v1611 = vxor.u32 %v1567, 2147483648
        %v1612 = vxor.u32 %v1570, 2147483648
        %v1613 = vxor.u32 %v1575, 2147483648
        %v1614 = vxor.u32 %v1578, 2147483648
        %v1615 = vxor.u32 %v1583, 2147483648
        %v1616 = vxor.u32 %v1586, 2147483648
        %v1617 = vxor.u32 %v1591, 2147483648
        %v1618 = vxor.u32 %v1594, 2147483648
        %v1619 = vxor.u32 %v1599, 2147483648
        %v1620 = vxor.u32 %v1602, 2147483648
        %v1621 = vmul.f32 %v1605, 1.442695
        %v1622 = vpow.pop %v1621
        %v1623 = vmul.f32 %v1606, 1.442695
        %v1624 = vpow.pop %v1623
        %v1625 = vmul.f32 %v1607, 1.442695
        %v1626 = vpow.pop %v1625
        %v1627 = vmul.f32 %v1608, 1.442695
        %v1628 = vpow.pop %v1627
        %v1629 = vmul.f32 %v1609, 1.442695
        %v1630 = vpow.pop %v1629
        %v1631 = vmul.f32 %v1610, 1.442695
        %v1632 = vpow.pop %v1631
        %v1633 = vmul.f32 %v1611, 1.442695
        %v1634 = vpow.pop %v1633
        %v1635 = vmul.f32 %v1612, 1.442695
        %v1636 = vpow.pop %v1635
        %v1637 = vmul.f32 %v1613, 1.442695
        %v1638 = vpow.pop %v1637
        %v1639 = vmul.f32 %v1614, 1.442695
        %v1640 = vpow.pop %v1639
        %v1641 = vmul.f32 %v1615, 1.442695
        %v1642 = vpow.pop %v1641
        %v1643 = vmul.f32 %v1616, 1.442695
        %v1644 = vpow.pop %v1643
        %v1645 = vmul.f32 %v1617, 1.442695
        %v1646 = vpow.pop %v1645
        %v1647 = vmul.f32 %v1618, 1.442695
        %v1648 = vpow.pop %v1647
        %v1649 = vmul.f32 %v1619, 1.442695
        %v1650 = vpow.pop %v1649
        %v1651 = vmul.f32 %v1620, 1.442695
        %v1652 = vpow.pop %v1651
        %v1653 = vadd.f32 %v1622, 1.0
        %v1654 = vadd.f32 %v1624, 1.0
        %v1655 = vadd.f32 %v1626, 1.0
        %v1656 = vadd.f32 %v1628, 1.0
        %v1657 = vadd.f32 %v1630, 1.0
        %v1658 = vadd.f32 %v1632, 1.0
        %v1659 = vadd.f32 %v1634, 1.0
        %v1660 = vadd.f32 %v1636, 1.0
        %v1661 = vadd.f32 %v1638, 1.0
        %v1662 = vadd.f32 %v1640, 1.0
        %v1663 = vadd.f32 %v1642, 1.0
        %v1664 = vadd.f32 %v1644, 1.0
        %v1665 = vadd.f32 %v1646, 1.0
        %v1666 = vadd.f32 %v1648, 1.0
        %v1667 = vadd.f32 %v1650, 1.0
        %v1668 = vadd.f32 %v1652, 1.0
        %v1669 = vrcp.pop %v1653
        %v1670 = vmul.f32 1.0, %v1669
        %v1671 = vrcp.pop %v1654
        %v1672 = vmul.f32 1.0, %v1671
        %v1673 = vrcp.pop %v1655
        %v1674 = vmul.f32 1.0, %v1673
        %v1675 = vrcp.pop %v1656
        %v1676 = vmul.f32 1.0, %v1675
        %v1677 = vrcp.pop %v1657
        %v1678 = vmul.f32 1.0, %v1677
        %v1679 = vrcp.pop %v1658
        %v1680 = vmul.f32 1.0, %v1679
        %v1681 = vrcp.pop %v1659
        %v1682 = vmul.f32 1.0, %v1681
        %v1683 = vrcp.pop %v1660
        %v1684 = vmul.f32 1.0, %v1683
        %v1685 = vrcp.pop %v1661
        %v1686 = vmul.f32 1.0, %v1685
        %v1687 = vrcp.pop %v1662
        %v1688 = vmul.f32 1.0, %v1687
        %v1689 = vrcp.pop %v1663
        %v1690 = vmul.f32 1.0, %v1689
        %v1691 = vrcp.pop %v1664
        %v1692 = vmul.f32 1.0, %v1691
        %v1693 = vrcp.pop %v1665
        %v1694 = vmul.f32 1.0, %v1693
        %v1695 = vrcp.pop %v1666
        %v1696 = vmul.f32 1.0, %v1695
        %v1697 = vrcp.pop %v1667
        %v1698 = vmul.f32 1.0, %v1697
        %v1699 = vrcp.pop %v1668
        %v1700 = vmul.f32 1.0, %v1699
        %v1701 = vmul.f32 %v1543, %v1670
        %v1702 = vmul.f32 %v1546, %v1672
        %v1703 = vmul.f32 %v1551, %v1674
        %v1704 = vmul.f32 %v1554, %v1676
        %v1705 = vmul.f32 %v1559, %v1678
        %v1706 = vmul.f32 %v1562, %v1680
        %v1707 = vmul.f32 %v1567, %v1682
        %v1708 = vmul.f32 %v1570, %v1684
        %v1709 = vmul.f32 %v1575, %v1686
        %v1710 = vmul.f32 %v1578, %v1688
        %v1711 = vmul.f32 %v1583, %v1690
        %v1712 = vmul.f32 %v1586, %v1692
        %v1713 = vmul.f32 %v1591, %v1694
        %v1714 = vmul.f32 %v1594, %v1696
        %v1715 = vmul.f32 %v1599, %v1698
        %v1716 = vmul.f32 %v1602, %v1700
        %v1717 = vpack.c.bf16 %v1702, %v1701
        %v1718 = vpack.c.bf16 %v1704, %v1703
        %v1719 = vpack.c.bf16 %v1706, %v1705
        %v1720 = vpack.c.bf16 %v1708, %v1707
        %v1721 = vpack.c.bf16 %v1710, %v1709
        %v1722 = vpack.c.bf16 %v1712, %v1711
        %v1723 = vpack.c.bf16 %v1714, %v1713
        %v1724 = vpack.c.bf16 %v1716, %v1715
        %v1725 = vld [vmem:[#allocation13] sm:$0xf]
        %v1726 = vld [vmem:[#allocation13 + $0x4] sm:$0xf]
        %v1727 = vld [vmem:[#allocation13 + $0x8] sm:$0xf]
        %v1728 = vld [vmem:[#allocation13 + $0xc] sm:$0xf]
        %v1729 = vld [vmem:[#allocation13 + $0x10] sm:$0xf]
        %v1730 = vld [vmem:[#allocation13 + $0x14] sm:$0xf]
        %v1731 = vld [vmem:[#allocation13 + $0x18] sm:$0xf]
        %v1732 = vld [vmem:[#allocation13 + $0x1c] sm:$0xf]
        %v1733 = vld [vmem:[#allocation13 + $0x20] sm:$0xf]
        %v1734 = vld [vmem:[#allocation13 + $0x24] sm:$0xf]
        %v1735 = vld [vmem:[#allocation13 + $0x28] sm:$0xf]
        %v1736 = vld [vmem:[#allocation13 + $0x2c] sm:$0xf]
        %v1737 = vld [vmem:[#allocation13 + $0x30] sm:$0xf]
        %v1738 = vld [vmem:[#allocation13 + $0x34] sm:$0xf]
        %v1739 = vld [vmem:[#allocation13 + $0x38] sm:$0xf]
        %v1740 = vld [vmem:[#allocation13 + $0x3c] sm:$0xf]
        %v1741 = vld [vmem:[%s11] sm:$0x1]
        %v1743 = vlaneseq
        %v1744 = vshrl.u32 %v1743, 7
        %v1745 = vsub.s32 0, %v1744
        %v1746 = vrot.slane %v1741, %v1745
        %v1764 = vunpack.c.l.b16 %v1725
        %v1765 = vunpack.c.l.b16 %v1726
        %v1766 = vunpack.c.l.b16 %v1727
        %v1767 = vunpack.c.l.b16 %v1728
        %v1768 = vunpack.c.l.b16 %v1729
        %v1769 = vunpack.c.l.b16 %v1730
        %v1770 = vunpack.c.l.b16 %v1731
        %v1771 = vunpack.c.l.b16 %v1732
        %v1772 = vunpack.c.l.b16 %v1733
        %v1773 = vunpack.c.l.b16 %v1734
        %v1774 = vunpack.c.l.b16 %v1735
        %v1775 = vunpack.c.l.b16 %v1736
        %v1776 = vunpack.c.l.b16 %v1737
        %v1777 = vunpack.c.l.b16 %v1738
        %v1778 = vunpack.c.l.b16 %v1739
        %v1779 = vunpack.c.l.b16 %v1740
        %v1780 = vpack.c.b16 %v1765, %v1764
        %v1781 = vpack.c.b16 %v1767, %v1766
        %v1782 = vpack.c.b16 %v1769, %v1768
        %v1783 = vpack.c.b16 %v1771, %v1770
        %v1784 = vpack.c.b16 %v1773, %v1772
        %v1785 = vpack.c.b16 %v1775, %v1774
        %v1786 = vpack.c.b16 %v1777, %v1776
        %v1787 = vpack.c.b16 %v1779, %v1778
        %1796 = vmatprep.subr.bf16.mxu0 0
        %1797 = vmatpush1.bf16.msra.mxu0 %v1787
        %1798 = vmatprep.subr.bf16.mxu0 0
        %1799 = vmatpush1.bf16.msra.mxu0 %v1786
        %1800 = vmatprep.subr.bf16.mxu0 0
        %1801 = vmatpush1.bf16.msra.mxu0 %v1785
        %1802 = vmatprep.subr.bf16.mxu0 0
        %1803 = vmatpush1.bf16.msra.mxu0 %v1784
        %1804 = vmatprep.subr.bf16.mxu0 0
        %1805 = vmatpush1.bf16.msra.mxu0 %v1783
        %1806 = vmatprep.subr.bf16.mxu0 0
        %1807 = vmatpush1.bf16.msra.mxu0 %v1782
        %1808 = vmatprep.subr.bf16.mxu0 0
        %1809 = vmatpush1.bf16.msra.mxu0 %v1781
        %1810 = vmatprep.subr.bf16.mxu0 0
        %1811 = vmatpush1.bf16.msra.mxu0 %v1780
        %1812 = vmatprep.subr.bf16.mxu0 0
        %1813 = vmatpush2.bf16.msra.mxu0 0
        %1814 = vmatprep.subr.bf16.mxu0 0
        %1815 = vmatpush2.bf16.msra.mxu0 0
        %1816 = vmatprep.subr.bf16.mxu0 0
        %1817 = vmatpush2.bf16.msra.mxu0 0
        %1818 = vmatprep.subr.bf16.mxu0 0
        %1819 = vmatpush2.bf16.msra.mxu0 0
        %1820 = vmatprep.subr.bf16.mxu0 0
        %1821 = vmatpush2.bf16.msra.mxu0 0
        %1822 = vmatprep.subr.bf16.mxu0 0
        %1823 = vmatpush2.bf16.msra.mxu0 0
        %1824 = vmatprep.subr.bf16.mxu0 0
        %1825 = vmatpush2.bf16.msra.mxu0 0
        %1826 = vmatprep.subr.bf16.mxu0 0
        %1827 = vmatpush2.bf16.msra.mxu0 0
        %1828 = vmatprep.mubr.bf16.mxu0 0
        %1829 = vmatmul.mubr.bf16.gmra.mxu0 %v1717
        %v1830 = vpop.f32.mrf.mxu0
        %v1831 = vadd.f32 %v1746, %v1830
        %v1832 = vpop.f32.mrf.mxu0
        %v1833 = vpop.f32.mrf.mxu0
        %v1834 = vadd.f32 %v1746, %v1833
        %v1835 = vpop.f32.mrf.mxu0
        %1836 = vmatprep.mubr.bf16.mxu0 0
        %1837 = vmatmul.mubr.bf16.gmra.mxu0 %v1718
        %v1838 = vpop.f32.mrf.mxu0
        %v1839 = vadd.f32 %v1746, %v1838
        %v1840 = vpop.f32.mrf.mxu0
        %v1841 = vpop.f32.mrf.mxu0
        %v1842 = vadd.f32 %v1746, %v1841
        %v1843 = vpop.f32.mrf.mxu0
        %1844 = vmatprep.mubr.bf16.mxu0 0
        %1845 = vmatmul.mubr.bf16.gmra.mxu0 %v1719
        %v1846 = vpop.f32.mrf.mxu0
        %v1847 = vadd.f32 %v1746, %v1846
        %v1848 = vpop.f32.mrf.mxu0
        %v1849 = vpop.f32.mrf.mxu0
        %v1850 = vadd.f32 %v1746, %v1849
        %v1851 = vpop.f32.mrf.mxu0
        %1852 = vmatprep.mubr.bf16.mxu0 0
        %1853 = vmatmul.mubr.bf16.gmra.mxu0 %v1720
        %v1854 = vpop.f32.mrf.mxu0
        %v1855 = vadd.f32 %v1746, %v1854
        %v1856 = vpop.f32.mrf.mxu0
        %v1857 = vpop.f32.mrf.mxu0
        %v1858 = vadd.f32 %v1746, %v1857
        %v1859 = vpop.f32.mrf.mxu0
        %1860 = vmatprep.mubr.bf16.mxu0 0
        %1861 = vmatmul.mubr.bf16.gmra.mxu0 %v1721
        %v1862 = vpop.f32.mrf.mxu0
        %v1863 = vadd.f32 %v1746, %v1862
        %v1864 = vpop.f32.mrf.mxu0
        %v1865 = vpop.f32.mrf.mxu0
        %v1866 = vadd.f32 %v1746, %v1865
        %v1867 = vpop.f32.mrf.mxu0
        %1868 = vmatprep.mubr.bf16.mxu0 0
        %1869 = vmatmul.mubr.bf16.gmra.mxu0 %v1722
        %v1870 = vpop.f32.mrf.mxu0
        %v1871 = vadd.f32 %v1746, %v1870
        %v1872 = vpop.f32.mrf.mxu0
        %v1873 = vpop.f32.mrf.mxu0
        %v1874 = vadd.f32 %v1746, %v1873
        %v1875 = vpop.f32.mrf.mxu0
        %1876 = vmatprep.mubr.bf16.mxu0 0
        %1877 = vmatmul.mubr.bf16.gmra.mxu0 %v1723
        %v1878 = vpop.f32.mrf.mxu0
        %v1879 = vadd.f32 %v1746, %v1878
        %v1880 = vpop.f32.mrf.mxu0
        %v1881 = vpop.f32.mrf.mxu0
        %v1882 = vadd.f32 %v1746, %v1881
        %v1883 = vpop.f32.mrf.mxu0
        %1884 = vmatprep.mubr.bf16.mxu0 0
        %1885 = vmatmul.mubr.bf16.gmra.mxu0 %v1724
        %v1886 = vpop.f32.mrf.mxu0
        %v1887 = vadd.f32 %v1746, %v1886
        %v1888 = vpop.f32.mrf.mxu0
        %v1889 = vpop.f32.mrf.mxu0
        %v1890 = vadd.f32 %v1746, %v1889
        %v1891 = vpop.f32.mrf.mxu0
        %1892 = vdwg.mxu0
        %v1893 = vmul.f32 %v1142, %v1831
        %v1894 = vmul.f32 %v1145, %v1834
        %v1895 = vmul.f32 %v1150, %v1839
        %v1896 = vmul.f32 %v1153, %v1842
        %v1897 = vmul.f32 %v1158, %v1847
        %v1898 = vmul.f32 %v1161, %v1850
        %v1899 = vmul.f32 %v1166, %v1855
        %v1900 = vmul.f32 %v1169, %v1858
        %v1901 = vmul.f32 %v1174, %v1863
        %v1902 = vmul.f32 %v1177, %v1866
        %v1903 = vmul.f32 %v1182, %v1871
        %v1904 = vmul.f32 %v1185, %v1874
        %v1905 = vmul.f32 %v1190, %v1879
        %v1906 = vmul.f32 %v1193, %v1882
        %v1907 = vmul.f32 %v1198, %v1887
        %v1908 = vmul.f32 %v1201, %v1890
        %v1909 = vadd.f32 %v548, %v1893
        %v1910 = vadd.f32 %v549, %v1894
        %v1911 = vadd.f32 %v550, %v1895
        %v1912 = vadd.f32 %v551, %v1896
        %v1913 = vadd.f32 %v552, %v1897
        %v1914 = vadd.f32 %v553, %v1898
        %v1915 = vadd.f32 %v554, %v1899
        %v1916 = vadd.f32 %v555, %v1900
        %v1917 = vadd.f32 %v556, %v1901
        %v1918 = vadd.f32 %v557, %v1902
        %v1919 = vadd.f32 %v558, %v1903
        %v1920 = vadd.f32 %v559, %v1904
        %v1921 = vadd.f32 %v560, %v1905
        %v1922 = vadd.f32 %v561, %v1906
        %v1923 = vadd.f32 %v562, %v1907
        %v1924 = vadd.f32 %v563, %v1908
        %1925 = vst [vmem:[%s543] sm:$0xff] %v1909
        %1926 = vst [vmem:[%s543 + $0x8] sm:$0xff] %v1910
        %1927 = vst [vmem:[%s543 + $0x10] sm:$0xff] %v1911
        %1928 = vst [vmem:[%s543 + $0x18] sm:$0xff] %v1912
        %1929 = vst [vmem:[%s543 + $0x20] sm:$0xff] %v1913
        %1930 = vst [vmem:[%s543 + $0x28] sm:$0xff] %v1914
        %1931 = vst [vmem:[%s543 + $0x30] sm:$0xff] %v1915
        %1932 = vst [vmem:[%s543 + $0x38] sm:$0xff] %v1916
        %1933 = vst [vmem:[%s543 + $0x40] sm:$0xff] %v1917
        %1934 = vst [vmem:[%s543 + $0x48] sm:$0xff] %v1918
        %1935 = vst [vmem:[%s543 + $0x50] sm:$0xff] %v1919
        %1936 = vst [vmem:[%s543 + $0x58] sm:$0xff] %v1920
        %1937 = vst [vmem:[%s543 + $0x60] sm:$0xff] %v1921
        %1938 = vst [vmem:[%s543 + $0x68] sm:$0xff] %v1922
        %1939 = vst [vmem:[%s543 + $0x70] sm:$0xff] %v1923
        %1940 = vst [vmem:[%s543 + $0x78] sm:$0xff] %v1924
        %s1941 = sand.u32 %s304, 1
        %s1942 = scalar_lea.sflag [#allocation4], %s1941
        %s1943 = sand.u32 %s304, 1
        %s1944 = smul.addr %s1943, 128
        %s1945 = scalar_lea.vmem [#allocation14], %s1944
        // Predicated region
        $region97: #{tpu_custom_call.1} parent=67 // pred_check
          %p1946 = pneg %p314
        $region98: #{tpu_custom_call.1} parent=67 // pred_check_branch
          %1948 = sbr.rel (%p1946) target = $region100
        $region99: #{tpu_custom_call.1} parent=67 // pred_region
          %s1949 = smul.u32 16, %s34
          %s1951 = ssub.s32 2048, 2048
          %1952 = vsyncadd %s1942, %s1951
          %s1953 = smul.addr %s1949, 128
          %s1954 = scalar_lea.hbm %s12, %s1953
          %s1955 = sshll.u32 %s1945, 4
          %s1956 = int_to_ptr.vmem [resolvable:$true] %s1955
          %1961 = dma.vmem_to_hbm [thread:$0]  %s1956, 2048, %s1954, %s1942, 128, 128, 8
        $region100: #{tpu_custom_call.1} parent=67 // pred_fallthru
          _
      $region68: #{tpu_custom_call.1} parent=5 // pred_fallthru
        _
      %p1962 = scmp.le.s32.totalorder 2, %s29
      // Predicated region
      $region101: #{tpu_custom_call.1} parent=5 // pred_check
        %p1963 = pneg %p1962
      $region102: #{tpu_custom_call.1} parent=5 // pred_check_branch
        %1965 = sbr.rel (%p1963) target = $region104
      $region103: #{tpu_custom_call.1} parent=5 // pred_region
        %s1966 = ssub.s32 %s29, 2
        // Predicated region
        $region105: #{tpu_custom_call.1} parent=103 // pred_check
          %p1967 = pneg %p320
        $region106: #{tpu_custom_call.1} parent=103 // pred_check_branch
          %1969 = sbr.rel (%p1967) target = $region108
        $region107: #{tpu_custom_call.1} parent=103 // pred_region
          %s1970 = sand.u32 %s305, 1
          %s1971 = scalar_lea.sflag [#allocation4], %s1970
          %s1972 = sand.u32 %s305, 1
          %s1973 = smul.addr %s1972, 128
          %s1974 = scalar_lea.vmem [#allocation14], %s1973
          %1975 = dma.done %s1971, 2048
        $region108: #{tpu_custom_call.1} parent=103 // pred_fallthru
          _
      $region104: #{tpu_custom_call.1} parent=5 // pred_fallthru
        _
    $region6: #{tpu_custom_call.1} parent=1 // loop_footer
      %s33 = sadd.s32 1, %s29
    $region7: #{tpu_custom_call.1} parent=1 // loop_footer_branch
      %28 = sbr.rel target = $region3
    $region8: #{tpu_custom_call.1} parent=1 // loop_exit
      _
    %1976 = vsyncpa [#allocation3], 1
    %s1977 = scalar_lea.sflag [#allocation3], 1
    %1978 = vsyncpa %s1977, 1
    %1979 = vsyncpa [#allocation6], 1
    %s1980 = scalar_lea.sflag [#allocation6], 1
    %1981 = vsyncpa %s1980, 1
    %1982 = vsyncpa [#allocation9], 1
    %1983 = vsyncpa [#allocation12], 1
    %1984 = vsyncpa [#allocation4], 1
    %s1985 = scalar_lea.sflag [#allocation4], 1
    %1986 = vsyncpa %s1985, 1

</llo_original>
